<compile_context>
chip_gen: v7x
topology: tpu7x:2x2x1
jax: 0.10.0
libtpu: 0.0.40
codegen_flags: <defaults>
</compile_context>

<pallas_src>
import functools
import math

import jax
import jax.numpy as jnp
from jax.experimental import pallas as pl
from jax.experimental.pallas import tpu as pltpu


# ----------------------------- in-kernel helpers -----------------------------

def _ln(x, g, b, eps):
    mean = jnp.mean(x, axis=-1, keepdims=True)
    xc = x - mean
    var = jnp.mean(jnp.square(xc), axis=-1, keepdims=True)
    return xc * jax.lax.rsqrt(var + eps) * g + b


# ----------------------------- fused BERT kernel (one grid step == one batch row) -----------------------------

def _bert_kernel(e_ref, bias_ref, glob_ref, small_ref,
                 qkvw_ref, ow_ref, iw_ref, fw_ref, fcw_ref,
                 out_ref, *, num_heads, scale, eps):
    S, H = e_ref.shape                      # (seq, hidden) for this batch element
    L = qkvw_ref.shape[0]
    I = iw_ref.shape[2]
    NH = num_heads
    Dh = H // NH

    glob = glob_ref[...]                    # (8, 128): [emb_ln_g, emb_ln_b, fc_b, ...]
    bias = bias_ref[...]                    # (NH*S, NH*S) additive attention bias (precomputed)

    # ---- embedding LayerNorm ----
    h = _ln(e_ref[...], glob[0:1, :H], glob[1:2, :H], eps)            # (S, H) f32 residual

    for l in range(L):                      # static unroll; weights stay resident in VMEM
        small = small_ref[l]                # (8, 128) packed per-layer biases / LN params

        # ---- fused QKV projection (bf16 x bf16 -> f32), single bf16 cast of the result ----
        qkv = jnp.dot(h.astype(jnp.bfloat16), qkvw_ref[l],
                      preferred_element_type=jnp.float32) + small[0:1, :3 * H]   # (S, 3H)
        qkv = qkv.astype(jnp.bfloat16)

        # ---- head-stack along sublanes: rows ordered [head0 tok0..S-1, head1 tok0..S-1, ...] ----
        q_st = jnp.concatenate([qkv[:, hh * Dh:(hh + 1) * Dh] for hh in range(NH)], axis=0)
        k_st = jnp.concatenate([qkv[:, H + hh * Dh:H + (hh + 1) * Dh] for hh in range(NH)], axis=0)
        v_st = jnp.concatenate([qkv[:, 2 * H + hh * Dh:2 * H + (hh + 1) * Dh] for hh in range(NH)], axis=0)

        # ---- ONE score matmul for all heads (contract Dh; no explicit k.T) ----
        s = jax.lax.dot_general(q_st, k_st, (((1,), (1,)), ((), ())),
                                preferred_element_type=jnp.float32)              # (NH*S, NH*S)
        s = s * scale + bias                      # block-diagonal head mask + key padding mask
        s = s - jnp.max(s, axis=-1, keepdims=True)
        p = jnp.exp(s)
        p = p / jnp.sum(p, axis=-1, keepdims=True)

        # ---- ONE context matmul for all heads ----
        ctx_st = jnp.dot(p.astype(jnp.bfloat16), v_st,
                         preferred_element_type=jnp.float32)                     # (NH*S, Dh)

        # ---- un-stack heads back to lanes, ONE output projection against the full o_w ----
        ctx = jnp.concatenate([ctx_st[hh * S:(hh + 1) * S, :] for hh in range(NH)], axis=1)  # (S, H)
        attn = jnp.dot(ctx.astype(jnp.bfloat16), ow_ref[l],
                       preferred_element_type=jnp.float32) + small[1:2, :H]

        # ---- residual + LayerNorm 1 ----
        h1 = _ln(attn + h, small[2:3, :H], small[3:4, :H], eps)

        # ---- FFN ----
        ffn = jnp.dot(h1.astype(jnp.bfloat16), iw_ref[l],
                      preferred_element_type=jnp.float32) + small[4:5, :I]
        # TODO(synk): HF BERT uses exact erf-GELU; tanh approximation used here (~1e-3 diff).
        ffn = jax.nn.gelu(ffn, approximate=True)
        ffn_out = jnp.dot(ffn.astype(jnp.bfloat16), fw_ref[l],
                          preferred_element_type=jnp.float32) + small[5:6, :H]

        # ---- residual + LayerNorm 2 ----
        h = _ln(ffn_out + h1, small[6:7, :H], small[7:8, :H], eps)

    # ---- CLS (row 0 of this batch element) -> classifier, lane-dense (8, 128) output slab ----
    logits = jnp.dot(h[0:1, :].astype(jnp.bfloat16), fcw_ref[...],
                     preferred_element_type=jnp.float32) + glob[2:3, :]          # (1, 128)
    out_ref[...] = jnp.broadcast_to(logits, out_ref.shape)


# ----------------------------- wrapper (glue: embedding gathers + mask build only) -----------------------------

def custom_bert_forward(packed, input_ids, attention_mask, token_type_ids,
                        *, num_heads, num_classes):
    B, S = input_ids.shape
    H = packed["word_emb"].shape[1]
    L = packed["qkv_w"].shape[0]
    I = packed["i_w"].shape[2]
    PAD = packed["fc_w_pad"].shape[1]
    Dh = H // num_heads
    NHS = num_heads * S
    scale = 1.0 / math.sqrt(Dh)
    assert 3 * H <= PAD and I <= PAD

    # embedding gathers stay in plain JAX (no clean Pallas equivalent without DMA gather)
    pos = jnp.arange(S, dtype=jnp.int32)
    e = (packed["word_emb"][input_ids]
         + packed["pos_emb"][pos][None, :, :]
         + packed["type_emb"][token_type_ids]).astype(jnp.float32)          # (B, S, H)

    # additive attention bias, precomputed once: key padding mask tiled across heads
    # plus a static block-diagonal mask separating the sublane-stacked heads.
    key_bias = (1.0 - attention_mask.astype(jnp.float32)) * -1e9            # (B, S)
    key_bias = jnp.tile(key_bias, (1, num_heads))                           # (B, NH*S)
    head_id = jnp.arange(NHS, dtype=jnp.int32) // S
    head_bias = jnp.where(head_id[:, None] == head_id[None, :], 0.0, -1e9)  # (NH*S, NH*S)
    attn_bias = key_bias[:, None, :] + head_bias[None, :, :]                # (B, NH*S, NH*S)

    kernel = functools.partial(_bert_kernel, num_heads=num_heads, scale=scale, eps=1e-12)

    out = pl.pallas_call(
        kernel,
        grid=(B,),
        in_specs=[
            pl.BlockSpec((None, S, H), lambda b: (b, 0, 0)),        # summed embeddings (per batch)
            pl.BlockSpec((None, NHS, NHS), lambda b: (b, 0, 0)),    # additive attention bias (per batch)
            pl.BlockSpec((8, PAD), lambda b: (0, 0)),               # globals: emb LN g/b, fc bias
            pl.BlockSpec((L, 8, PAD), lambda b: (0, 0, 0)),         # packed per-layer biases / LN params
            pl.BlockSpec((L, H, 3 * H), lambda b: (0, 0, 0)),       # fused QKV weights
            pl.BlockSpec((L, H, H), lambda b: (0, 0, 0)),           # output projection weights
            pl.BlockSpec((L, H, I), lambda b: (0, 0, 0)),           # FFN in weights
            pl.BlockSpec((L, I, H), lambda b: (0, 0, 0)),           # FFN out weights
            pl.BlockSpec((H, PAD), lambda b: (0, 0)),               # padded classifier weight
        ],
        out_specs=pl.BlockSpec((None, 8, PAD), lambda b: (b, 0, 0)),
        out_shape=jax.ShapeDtypeStruct((B, 8, PAD), jnp.float32),
        compiler_params=pltpu.CompilerParams(dimension_semantics=("parallel",)),
    )(e, attn_bias, packed["glob"], packed["small"],
      packed["qkv_w"], packed["o_w"], packed["i_w"], packed["f_w"], packed["fc_w_pad"])

    # nn.Dropout(p=0.5) -> identity at inference; slice padded logits back to num_classes
    return out[:, 0, :num_classes]


# ----------------------------- deterministic parameter init + packing -----------------------------

def init_params(key, *, vocab, type_vocab, max_pos, hidden, num_layers, intermediate, num_classes):
    def nrm(k, shape, scale=0.02):
        return scale * jax.random.normal(k, shape, dtype=jnp.float32)

    keys = iter(jax.random.split(key, 16 + num_layers * 32))
    params = {
        "word_emb": nrm(next(keys), (vocab, hidden)),
        "pos_emb": nrm(next(keys), (max_pos, hidden)),
        "type_emb": nrm(next(keys), (type_vocab, hidden)),
        "emb_ln_g": jnp.ones((hidden,), jnp.float32),
        "emb_ln_b": jnp.zeros((hidden,), jnp.float32),
        "fc_w": nrm(next(keys), (hidden, num_classes)),
        "fc_b": jnp.zeros((num_classes,), jnp.float32),
        "layers": [],
    }
    for _ in range(num_layers):
        params["layers"].append({
            "q_w": nrm(next(keys), (hidden, hidden)), "q_b": jnp.zeros((hidden,), jnp.float32),
            "k_w": nrm(next(keys), (hidden, hidden)), "k_b": jnp.zeros((hidden,), jnp.float32),
            "v_w": nrm(next(keys), (hidden, hidden)), "v_b": jnp.zeros((hidden,), jnp.float32),
            "o_w": nrm(next(keys), (hidden, hidden)), "o_b": jnp.zeros((hidden,), jnp.float32),
            "ln1_g": jnp.ones((hidden,), jnp.float32), "ln1_b": jnp.zeros((hidden,), jnp.float32),
            "i_w": nrm(next(keys), (hidden, intermediate)), "i_b": jnp.zeros((intermediate,), jnp.float32),
            "f_w": nrm(next(keys), (intermediate, hidden)), "f_b": jnp.zeros((hidden,), jnp.float32),
            "ln2_g": jnp.ones((hidden,), jnp.float32), "ln2_b": jnp.zeros((hidden,), jnp.float32),
        })
    return params


def pack_params(params, *, num_classes, lane_pad=128):
    """Fuse QKV, stack per-layer matmul weights (bf16), coalesce all small per-layer
    bias / LN vectors into one (L, 8, 128) slab and the globals into one (8, 128) slab."""
    layers = params["layers"]
    H = params["word_emb"].shape[1]
    I = layers[0]["i_w"].shape[1]
    assert 3 * H <= lane_pad and I <= lane_pad and num_classes <= lane_pad

    def pad_row(v):
        return jnp.zeros((lane_pad,), jnp.float32).at[:v.shape[0]].set(v)

    qkv_w = jnp.stack([jnp.concatenate([l["q_w"], l["k_w"], l["v_w"]], axis=1)
                       for l in layers]).astype(jnp.bfloat16)                       # (L, H, 3H)
    o_w = jnp.stack([l["o_w"] for l in layers]).astype(jnp.bfloat16)                # (L, H, H)
    i_w = jnp.stack([l["i_w"] for l in layers]).astype(jnp.bfloat16)                # (L, H, I)
    f_w = jnp.stack([l["f_w"] for l in layers]).astype(jnp.bfloat16)                # (L, I, H)

    small = jnp.stack([jnp.stack([
        pad_row(jnp.concatenate([l["q_b"], l["k_b"], l["v_b"]])),                   # row 0: qkv bias
        pad_row(l["o_b"]),                                                          # row 1: o bias
        pad_row(l["ln1_g"]), pad_row(l["ln1_b"]),                                   # rows 2,3: LN1
        pad_row(l["i_b"]),                                                          # row 4: FFN-in bias
        pad_row(l["f_b"]),                                                          # row 5: FFN-out bias
        pad_row(l["ln2_g"]), pad_row(l["ln2_b"]),                                   # rows 6,7: LN2
    ]) for l in layers])                                                            # (L, 8, 128) f32

    glob = jnp.stack([pad_row(params["emb_ln_g"]),
                      pad_row(params["emb_ln_b"]),
                      pad_row(params["fc_b"])]
                     + [jnp.zeros((lane_pad,), jnp.float32)] * 5)                   # (8, 128) f32

    fc_w_pad = (jnp.zeros((H, lane_pad), jnp.float32)
                .at[:, :num_classes].set(params["fc_w"]).astype(jnp.bfloat16))      # (H, 128)

    return {
        "word_emb": params["word_emb"], "pos_emb": params["pos_emb"], "type_emb": params["type_emb"],
        "glob": glob, "small": small,
        "qkv_w": qkv_w, "o_w": o_w, "i_w": i_w, "f_w": f_w,
        "fc_w_pad": fc_w_pad,
    }


# ----------------------------- pure-JAX reference (for a loose numerical check) -----------------------------

def reference_forward(params, input_ids, attention_mask, token_type_ids, *, num_heads, eps=1e-12):
    B, S = input_ids.shape
    H = params["word_emb"].shape[1]
    Dh = H // num_heads
    pos = jnp.arange(S, dtype=jnp.int32)
    x = (params["word_emb"][input_ids] + params["pos_emb"][pos][None] + params["type_emb"][token_type_ids])

    def ln(x, g, b):
        m = x.mean(-1, keepdims=True)
        v = jnp.square(x - m).mean(-1, keepdims=True)
        return (x - m) / jnp.sqrt(v + eps) * g + b

    x = ln(x, params["emb_ln_g"], params["emb_ln_b"])
    mask = (1.0 - attention_mask.astype(jnp.float32)) * -1e9
    for lyr in params["layers"]:
        q = (x @ lyr["q_w"] + lyr["q_b"]).reshape(B, S, num_heads, Dh).transpose(0, 2, 1, 3)
        k = (x @ lyr["k_w"] + lyr["k_b"]).reshape(B, S, num_heads, Dh).transpose(0, 2, 1, 3)
        v = (x @ lyr["v_w"] + lyr["v_b"]).reshape(B, S, num_heads, Dh).transpose(0, 2, 1, 3)
        s = jnp.einsum("bhqd,bhkd->bhqk", q, k) / math.sqrt(Dh) + mask[:, None, None, :]
        p = jax.nn.softmax(s, axis=-1)
        ctx = jnp.einsum("bhqk,bhkd->bhqd", p, v).transpose(0, 2, 1, 3).reshape(B, S, H)
        x = ln(ctx @ lyr["o_w"] + lyr["o_b"] + x, lyr["ln1_g"], lyr["ln1_b"])
        f = jax.nn.gelu(x @ lyr["i_w"] + lyr["i_b"], approximate=True)
        x = ln(f @ lyr["f_w"] + lyr["f_b"] + x, lyr["ln2_g"], lyr["ln2_b"])
    return x[:, 0, :] @ params["fc_w"] + params["fc_b"]


# ----------------------------- main -----------------------------

if __name__ == "__main__":
    B, S = 2, 8
    HIDDEN, NUM_HEADS, NUM_LAYERS, INTERMEDIATE = 32, 2, 2, 64
    VOCAB, TYPE_VOCAB, MAX_POS, NUM_CLASSES = 128, 2, 16, 2

    root = jax.random.PRNGKey(0)
    k_params, k_ids, k_types = jax.random.split(root, 3)

    params = init_params(
        k_params, vocab=VOCAB, type_vocab=TYPE_VOCAB, max_pos=MAX_POS,
        hidden=HIDDEN, num_layers=NUM_LAYERS, intermediate=INTERMEDIATE,
        num_classes=NUM_CLASSES)
    packed = pack_params(params, num_classes=NUM_CLASSES)

    input_ids = jax.random.randint(k_ids, (B, S), 0, VOCAB, dtype=jnp.int32)
    token_type_ids = jax.random.randint(k_types, (B, S), 0, TYPE_VOCAB, dtype=jnp.int32)
    attention_mask = jnp.ones((B, S), jnp.int32).at[:, S - 2:].set(0)   # last 2 tokens padded

    fwd = jax.jit(functools.partial(custom_bert_forward,
                                    num_heads=NUM_HEADS, num_classes=NUM_CLASSES))
    logits = fwd(packed, input_ids, attention_mask, token_type_ids)
    jax.block_until_ready(logits)

    ref = reference_forward(params, input_ids, attention_mask, token_type_ids, num_heads=NUM_HEADS)

    assert logits.shape == (B, NUM_CLASSES) and logits.dtype == jnp.float32
    assert bool(jnp.all(jnp.isfinite(logits)))
    assert bool(jnp.allclose(logits, ref, atol=5e-2, rtol=0.0))   # loose: bf16 weights vs f32 ref
    print("KERNEL_OK")
</pallas_src>

<mosaic_0001>
module attributes {stable_mosaic.version = 11 : i64} {
  func.func @_bert_kernel(%arg0: i32, %arg1: memref<1x8x32xf32, #tpu.memory_space<vmem>>, %arg2: memref<1x16x16xf32, #tpu.memory_space<vmem>>, %arg3: memref<8x128xf32, #tpu.memory_space<vmem>>, %arg4: memref<2x8x128xf32, #tpu.memory_space<vmem>>, %arg5: memref<2x32x96xbf16, #tpu.memory_space<vmem>>, %arg6: memref<2x32x32xbf16, #tpu.memory_space<vmem>>, %arg7: memref<2x32x64xbf16, #tpu.memory_space<vmem>>, %arg8: memref<2x64x32xbf16, #tpu.memory_space<vmem>>, %arg9: memref<32x128xbf16, #tpu.memory_space<vmem>>, %arg10: memref<1x8x128xf32, #tpu.memory_space<vmem>>) attributes {dimension_semantics = [#tpu.dimension_semantics<parallel>], iteration_bounds = array<i64: 2>, scalar_prefetch = 0 : i64, scratch_operands = 0 : i64, tpu.core_type = #tpu.core_type<tc>, window_params = [{transform_indices = @transform_0, window_bounds = array<i64: 1, 8, 32>}, {transform_indices = @transform_1, window_bounds = array<i64: 1, 16, 16>}, {pipeline_mode = #tpu.pipeline_mode<synchronous>, transform_indices = @transform_2, window_bounds = array<i64: 8, 128>}, {pipeline_mode = #tpu.pipeline_mode<synchronous>, transform_indices = @transform_3, window_bounds = array<i64: 2, 8, 128>}, {pipeline_mode = #tpu.pipeline_mode<synchronous>, transform_indices = @transform_4, window_bounds = array<i64: 2, 32, 96>}, {pipeline_mode = #tpu.pipeline_mode<synchronous>, transform_indices = @transform_5, window_bounds = array<i64: 2, 32, 32>}, {pipeline_mode = #tpu.pipeline_mode<synchronous>, transform_indices = @transform_6, window_bounds = array<i64: 2, 32, 64>}, {pipeline_mode = #tpu.pipeline_mode<synchronous>, transform_indices = @transform_7, window_bounds = array<i64: 2, 64, 32>}, {pipeline_mode = #tpu.pipeline_mode<synchronous>, transform_indices = @transform_8, window_bounds = array<i64: 32, 128>}, {transform_indices = @transform_9, window_bounds = array<i64: 1, 8, 128>}]} {
    %c0 = arith.constant 0 : index
    %c0_0 = arith.constant 0 : index
    %0 = vector.load %arg3[%c0, %c0_0] : memref<8x128xf32, #tpu.memory_space<vmem>>, vector<8x128xf32>
    %c0_1 = arith.constant 0 : index
    %c0_2 = arith.constant 0 : index
    %c0_3 = arith.constant 0 : index
    %1 = vector.load %arg2[%c0_1, %c0_2, %c0_3] : memref<1x16x16xf32, #tpu.memory_space<vmem>>, vector<1x16x16xf32>
    %2 = vector.shape_cast %1 : vector<1x16x16xf32> to vector<16x16xf32>
    %c0_4 = arith.constant 0 : index
    %c0_5 = arith.constant 0 : index
    %c0_6 = arith.constant 0 : index
    %3 = vector.load %arg1[%c0_4, %c0_5, %c0_6] : memref<1x8x32xf32, #tpu.memory_space<vmem>>, vector<1x8x32xf32>
    %4 = vector.shape_cast %3 : vector<1x8x32xf32> to vector<8x32xf32>
    %5 = vector.extract_strided_slice %0 {offsets = [0, 0], sizes = [1, 32], strides = [1, 1]} : vector<8x128xf32> to vector<1x32xf32>
    %6 = vector.extract_strided_slice %0 {offsets = [1, 0], sizes = [1, 32], strides = [1, 1]} : vector<8x128xf32> to vector<1x32xf32>
    %cst = arith.constant dense<0.000000e+00> : vector<8xf32>
    %7 = vector.multi_reduction <add>, %4, %cst [1] : vector<8x32xf32> to vector<8xf32>
    %8 = vector.shape_cast %7 : vector<8xf32> to vector<8x1xf32>
    %cst_7 = arith.constant 3.200000e+01 : f32
    %9 = vector.broadcast %cst_7 : f32 to vector<8x1xf32>
    %10 = arith.divf %8, %9 : vector<8x1xf32>
    %11 = vector.broadcast %10 : vector<8x1xf32> to vector<8x32xf32>
    %12 = arith.subf %4, %11 : vector<8x32xf32>
    %13 = arith.mulf %12, %12 : vector<8x32xf32>
    %cst_8 = arith.constant dense<0.000000e+00> : vector<8xf32>
    %14 = vector.multi_reduction <add>, %13, %cst_8 [1] : vector<8x32xf32> to vector<8xf32>
    %15 = vector.shape_cast %14 : vector<8xf32> to vector<8x1xf32>
    %cst_9 = arith.constant 3.200000e+01 : f32
    %16 = vector.broadcast %cst_9 : f32 to vector<8x1xf32>
    %17 = arith.divf %15, %16 : vector<8x1xf32>
    %cst_10 = arith.constant 9.99999996E-13 : f32
    %18 = vector.broadcast %cst_10 : f32 to vector<8x1xf32>
    %19 = arith.addf %17, %18 : vector<8x1xf32>
    %20 = math.rsqrt %19 : vector<8x1xf32>
    %21 = vector.broadcast %20 : vector<8x1xf32> to vector<8x32xf32>
    %22 = arith.mulf %12, %21 : vector<8x32xf32>
    %23 = vector.broadcast %5 : vector<1x32xf32> to vector<8x32xf32>
    %24 = arith.mulf %22, %23 : vector<8x32xf32>
    %25 = vector.broadcast %6 : vector<1x32xf32> to vector<8x32xf32>
    %26 = arith.addf %24, %25 : vector<8x32xf32>
    %c0_11 = arith.constant 0 : index
    %c0_12 = arith.constant 0 : index
    %c0_13 = arith.constant 0 : index
    %27 = vector.load %arg4[%c0_11, %c0_12, %c0_13] : memref<2x8x128xf32, #tpu.memory_space<vmem>>, vector<1x8x128xf32>
    %28 = vector.shape_cast %27 : vector<1x8x128xf32> to vector<8x128xf32>
    %29 = arith.truncf %26 : vector<8x32xf32> to vector<8x32xbf16>
    %c0_14 = arith.constant 0 : index
    %c0_15 = arith.constant 0 : index
    %c0_16 = arith.constant 0 : index
    %30 = vector.load %arg5[%c0_14, %c0_15, %c0_16] : memref<2x32x96xbf16, #tpu.memory_space<vmem>>, vector<1x32x96xbf16>
    %31 = vector.shape_cast %30 : vector<1x32x96xbf16> to vector<32x96xbf16>
    %cst_17 = arith.constant dense<0.000000e+00> : vector<8x96xf32>
    %32 = tpu.matmul %29, %31, %cst_17 {dimension_numbers = #tpu.dot_dimension_numbers<[1], [0], [0], [1], [0, 0, 1, 1], [], []>} : vector<8x32xbf16>, vector<32x96xbf16>, vector<8x96xf32> -> vector<8x96xf32>
    %33 = vector.extract_strided_slice %28 {offsets = [0, 0], sizes = [1, 96], strides = [1, 1]} : vector<8x128xf32> to vector<1x96xf32>
    %34 = vector.broadcast %33 : vector<1x96xf32> to vector<8x96xf32>
    %35 = arith.addf %32, %34 : vector<8x96xf32>
    %36 = arith.truncf %35 : vector<8x96xf32> to vector<8x96xbf16>
    %37 = vector.extract_strided_slice %36 {offsets = [0, 0], sizes = [8, 16], strides = [1, 1]} : vector<8x96xbf16> to vector<8x16xbf16>
    %38 = vector.extract_strided_slice %36 {offsets = [0, 16], sizes = [8, 16], strides = [1, 1]} : vector<8x96xbf16> to vector<8x16xbf16>
    %39 = tpu.concatenate %37, %38 in 0 : vector<8x16xbf16>, vector<8x16xbf16> -> vector<16x16xbf16>
    %40 = vector.extract_strided_slice %36 {offsets = [0, 32], sizes = [8, 16], strides = [1, 1]} : vector<8x96xbf16> to vector<8x16xbf16>
    %41 = vector.extract_strided_slice %36 {offsets = [0, 48], sizes = [8, 16], strides = [1, 1]} : vector<8x96xbf16> to vector<8x16xbf16>
    %42 = tpu.concatenate %40, %41 in 0 : vector<8x16xbf16>, vector<8x16xbf16> -> vector<16x16xbf16>
    %43 = vector.extract_strided_slice %36 {offsets = [0, 64], sizes = [8, 16], strides = [1, 1]} : vector<8x96xbf16> to vector<8x16xbf16>
    %44 = vector.extract_strided_slice %36 {offsets = [0, 80], sizes = [8, 16], strides = [1, 1]} : vector<8x96xbf16> to vector<8x16xbf16>
    %45 = tpu.concatenate %43, %44 in 0 : vector<8x16xbf16>, vector<8x16xbf16> -> vector<16x16xbf16>
    %cst_18 = arith.constant dense<0.000000e+00> : vector<16x16xf32>
    %46 = tpu.matmul %39, %42, %cst_18 {dimension_numbers = #tpu.dot_dimension_numbers<[1], [1], [0], [0], [0, 0, 1, 0], [], []>} : vector<16x16xbf16>, vector<16x16xbf16>, vector<16x16xf32> -> vector<16x16xf32>
    %cst_19 = arith.constant 2.500000e-01 : f32
    %47 = vector.broadcast %cst_19 : f32 to vector<16x16xf32>
    %48 = arith.mulf %46, %47 : vector<16x16xf32>
    %49 = arith.addf %48, %2 : vector<16x16xf32>
    %cst_20 = arith.constant dense<0xFF800000> : vector<16xf32>
    %50 = vector.multi_reduction <maximumf>, %49, %cst_20 [1] : vector<16x16xf32> to vector<16xf32>
    %51 = vector.shape_cast %50 : vector<16xf32> to vector<16x1xf32>
    %52 = vector.broadcast %51 : vector<16x1xf32> to vector<16x16xf32>
    %53 = arith.subf %49, %52 : vector<16x16xf32>
    %54 = math.exp %53 : vector<16x16xf32>
    %cst_21 = arith.constant dense<0.000000e+00> : vector<16xf32>
    %55 = vector.multi_reduction <add>, %54, %cst_21 [1] : vector<16x16xf32> to vector<16xf32>
    %56 = vector.shape_cast %55 : vector<16xf32> to vector<16x1xf32>
    %57 = vector.broadcast %56 : vector<16x1xf32> to vector<16x16xf32>
    %58 = arith.divf %54, %57 : vector<16x16xf32>
    %59 = arith.truncf %58 : vector<16x16xf32> to vector<16x16xbf16>
    %cst_22 = arith.constant dense<0.000000e+00> : vector<16x16xf32>
    %60 = tpu.matmul %59, %45, %cst_22 {dimension_numbers = #tpu.dot_dimension_numbers<[1], [0], [0], [1], [0, 0, 1, 1], [], []>} : vector<16x16xbf16>, vector<16x16xbf16>, vector<16x16xf32> -> vector<16x16xf32>
    %61 = vector.extract_strided_slice %60 {offsets = [0, 0], sizes = [8, 16], strides = [1, 1]} : vector<16x16xf32> to vector<8x16xf32>
    %62 = vector.extract_strided_slice %60 {offsets = [8, 0], sizes = [8, 16], strides = [1, 1]} : vector<16x16xf32> to vector<8x16xf32>
    %63 = tpu.concatenate %61, %62 in 1 : vector<8x16xf32>, vector<8x16xf32> -> vector<8x32xf32>
    %64 = arith.truncf %63 : vector<8x32xf32> to vector<8x32xbf16>
    %c0_23 = arith.constant 0 : index
    %c0_24 = arith.constant 0 : index
    %c0_25 = arith.constant 0 : index
    %65 = vector.load %arg6[%c0_23, %c0_24, %c0_25] : memref<2x32x32xbf16, #tpu.memory_space<vmem>>, vector<1x32x32xbf16>
    %66 = vector.shape_cast %65 : vector<1x32x32xbf16> to vector<32x32xbf16>
    %cst_26 = arith.constant dense<0.000000e+00> : vector<8x32xf32>
    %67 = tpu.matmul %64, %66, %cst_26 {dimension_numbers = #tpu.dot_dimension_numbers<[1], [0], [0], [1], [0, 0, 1, 1], [], []>} : vector<8x32xbf16>, vector<32x32xbf16>, vector<8x32xf32> -> vector<8x32xf32>
    %68 = vector.extract_strided_slice %28 {offsets = [1, 0], sizes = [1, 32], strides = [1, 1]} : vector<8x128xf32> to vector<1x32xf32>
    %69 = vector.broadcast %68 : vector<1x32xf32> to vector<8x32xf32>
    %70 = arith.addf %67, %69 : vector<8x32xf32>
    %71 = arith.addf %70, %26 : vector<8x32xf32>
    %72 = vector.extract_strided_slice %28 {offsets = [2, 0], sizes = [1, 32], strides = [1, 1]} : vector<8x128xf32> to vector<1x32xf32>
    %73 = vector.extract_strided_slice %28 {offsets = [3, 0], sizes = [1, 32], strides = [1, 1]} : vector<8x128xf32> to vector<1x32xf32>
    %cst_27 = arith.constant dense<0.000000e+00> : vector<8xf32>
    %74 = vector.multi_reduction <add>, %71, %cst_27 [1] : vector<8x32xf32> to vector<8xf32>
    %75 = vector.shape_cast %74 : vector<8xf32> to vector<8x1xf32>
    %cst_28 = arith.constant 3.200000e+01 : f32
    %76 = vector.broadcast %cst_28 : f32 to vector<8x1xf32>
    %77 = arith.divf %75, %76 : vector<8x1xf32>
    %78 = vector.broadcast %77 : vector<8x1xf32> to vector<8x32xf32>
    %79 = arith.subf %71, %78 : vector<8x32xf32>
    %80 = arith.mulf %79, %79 : vector<8x32xf32>
    %cst_29 = arith.constant dense<0.000000e+00> : vector<8xf32>
    %81 = vector.multi_reduction <add>, %80, %cst_29 [1] : vector<8x32xf32> to vector<8xf32>
    %82 = vector.shape_cast %81 : vector<8xf32> to vector<8x1xf32>
    %cst_30 = arith.constant 3.200000e+01 : f32
    %83 = vector.broadcast %cst_30 : f32 to vector<8x1xf32>
    %84 = arith.divf %82, %83 : vector<8x1xf32>
    %cst_31 = arith.constant 9.99999996E-13 : f32
    %85 = vector.broadcast %cst_31 : f32 to vector<8x1xf32>
    %86 = arith.addf %84, %85 : vector<8x1xf32>
    %87 = math.rsqrt %86 : vector<8x1xf32>
    %88 = vector.broadcast %87 : vector<8x1xf32> to vector<8x32xf32>
    %89 = arith.mulf %79, %88 : vector<8x32xf32>
    %90 = vector.broadcast %72 : vector<1x32xf32> to vector<8x32xf32>
    %91 = arith.mulf %89, %90 : vector<8x32xf32>
    %92 = vector.broadcast %73 : vector<1x32xf32> to vector<8x32xf32>
    %93 = arith.addf %91, %92 : vector<8x32xf32>
    %94 = arith.truncf %93 : vector<8x32xf32> to vector<8x32xbf16>
    %c0_32 = arith.constant 0 : index
    %c0_33 = arith.constant 0 : index
    %c0_34 = arith.constant 0 : index
    %95 = vector.load %arg7[%c0_32, %c0_33, %c0_34] : memref<2x32x64xbf16, #tpu.memory_space<vmem>>, vector<1x32x64xbf16>
    %96 = vector.shape_cast %95 : vector<1x32x64xbf16> to vector<32x64xbf16>
    %cst_35 = arith.constant dense<0.000000e+00> : vector<8x64xf32>
    %97 = tpu.matmul %94, %96, %cst_35 {dimension_numbers = #tpu.dot_dimension_numbers<[1], [0], [0], [1], [0, 0, 1, 1], [], []>} : vector<8x32xbf16>, vector<32x64xbf16>, vector<8x64xf32> -> vector<8x64xf32>
    %98 = vector.extract_strided_slice %28 {offsets = [4, 0], sizes = [1, 64], strides = [1, 1]} : vector<8x128xf32> to vector<1x64xf32>
    %99 = vector.broadcast %98 : vector<1x64xf32> to vector<8x64xf32>
    %100 = arith.addf %97, %99 : vector<8x64xf32>
    %101 = arith.mulf %100, %100 : vector<8x64xf32>
    %102 = arith.mulf %100, %101 : vector<8x64xf32>
    %cst_36 = arith.constant 4.471500e-02 : f32
    %103 = vector.broadcast %cst_36 : f32 to vector<8x64xf32>
    %104 = arith.mulf %103, %102 : vector<8x64xf32>
    %105 = arith.addf %100, %104 : vector<8x64xf32>
    %cst_37 = arith.constant 0.797884583 : f32
    %106 = vector.broadcast %cst_37 : f32 to vector<8x64xf32>
    %107 = arith.mulf %106, %105 : vector<8x64xf32>
    %108 = math.tanh %107 : vector<8x64xf32>
    %cst_38 = arith.constant 1.000000e+00 : f32
    %109 = vector.broadcast %cst_38 : f32 to vector<8x64xf32>
    %110 = arith.addf %109, %108 : vector<8x64xf32>
    %cst_39 = arith.constant 5.000000e-01 : f32
    %111 = vector.broadcast %cst_39 : f32 to vector<8x64xf32>
    %112 = arith.mulf %111, %110 : vector<8x64xf32>
    %113 = arith.mulf %100, %112 : vector<8x64xf32>
    %114 = arith.truncf %113 : vector<8x64xf32> to vector<8x64xbf16>
    %c0_40 = arith.constant 0 : index
    %c0_41 = arith.constant 0 : index
    %c0_42 = arith.constant 0 : index
    %115 = vector.load %arg8[%c0_40, %c0_41, %c0_42] : memref<2x64x32xbf16, #tpu.memory_space<vmem>>, vector<1x64x32xbf16>
    %116 = vector.shape_cast %115 : vector<1x64x32xbf16> to vector<64x32xbf16>
    %cst_43 = arith.constant dense<0.000000e+00> : vector<8x32xf32>
    %117 = tpu.matmul %114, %116, %cst_43 {dimension_numbers = #tpu.dot_dimension_numbers<[1], [0], [0], [1], [0, 0, 1, 1], [], []>} : vector<8x64xbf16>, vector<64x32xbf16>, vector<8x32xf32> -> vector<8x32xf32>
    %118 = vector.extract_strided_slice %28 {offsets = [5, 0], sizes = [1, 32], strides = [1, 1]} : vector<8x128xf32> to vector<1x32xf32>
    %119 = vector.broadcast %118 : vector<1x32xf32> to vector<8x32xf32>
    %120 = arith.addf %117, %119 : vector<8x32xf32>
    %121 = arith.addf %120, %93 : vector<8x32xf32>
    %122 = vector.extract_strided_slice %28 {offsets = [6, 0], sizes = [1, 32], strides = [1, 1]} : vector<8x128xf32> to vector<1x32xf32>
    %123 = vector.extract_strided_slice %28 {offsets = [7, 0], sizes = [1, 32], strides = [1, 1]} : vector<8x128xf32> to vector<1x32xf32>
    %cst_44 = arith.constant dense<0.000000e+00> : vector<8xf32>
    %124 = vector.multi_reduction <add>, %121, %cst_44 [1] : vector<8x32xf32> to vector<8xf32>
    %125 = vector.shape_cast %124 : vector<8xf32> to vector<8x1xf32>
    %cst_45 = arith.constant 3.200000e+01 : f32
    %126 = vector.broadcast %cst_45 : f32 to vector<8x1xf32>
    %127 = arith.divf %125, %126 : vector<8x1xf32>
    %128 = vector.broadcast %127 : vector<8x1xf32> to vector<8x32xf32>
    %129 = arith.subf %121, %128 : vector<8x32xf32>
    %130 = arith.mulf %129, %129 : vector<8x32xf32>
    %cst_46 = arith.constant dense<0.000000e+00> : vector<8xf32>
    %131 = vector.multi_reduction <add>, %130, %cst_46 [1] : vector<8x32xf32> to vector<8xf32>
    %132 = vector.shape_cast %131 : vector<8xf32> to vector<8x1xf32>
    %cst_47 = arith.constant 3.200000e+01 : f32
    %133 = vector.broadcast %cst_47 : f32 to vector<8x1xf32>
    %134 = arith.divf %132, %133 : vector<8x1xf32>
    %cst_48 = arith.constant 9.99999996E-13 : f32
    %135 = vector.broadcast %cst_48 : f32 to vector<8x1xf32>
    %136 = arith.addf %134, %135 : vector<8x1xf32>
    %137 = math.rsqrt %136 : vector<8x1xf32>
    %138 = vector.broadcast %137 : vector<8x1xf32> to vector<8x32xf32>
    %139 = arith.mulf %129, %138 : vector<8x32xf32>
    %140 = vector.broadcast %122 : vector<1x32xf32> to vector<8x32xf32>
    %141 = arith.mulf %139, %140 : vector<8x32xf32>
    %142 = vector.broadcast %123 : vector<1x32xf32> to vector<8x32xf32>
    %143 = arith.addf %141, %142 : vector<8x32xf32>
    %c1 = arith.constant 1 : index
    %c0_49 = arith.constant 0 : index
    %c0_50 = arith.constant 0 : index
    %144 = vector.load %arg4[%c1, %c0_49, %c0_50] : memref<2x8x128xf32, #tpu.memory_space<vmem>>, vector<1x8x128xf32>
    %145 = vector.shape_cast %144 : vector<1x8x128xf32> to vector<8x128xf32>
    %146 = arith.truncf %143 : vector<8x32xf32> to vector<8x32xbf16>
    %c1_51 = arith.constant 1 : index
    %c0_52 = arith.constant 0 : index
    %c0_53 = arith.constant 0 : index
    %147 = vector.load %arg5[%c1_51, %c0_52, %c0_53] : memref<2x32x96xbf16, #tpu.memory_space<vmem>>, vector<1x32x96xbf16>
    %148 = vector.shape_cast %147 : vector<1x32x96xbf16> to vector<32x96xbf16>
    %cst_54 = arith.constant dense<0.000000e+00> : vector<8x96xf32>
    %149 = tpu.matmul %146, %148, %cst_54 {dimension_numbers = #tpu.dot_dimension_numbers<[1], [0], [0], [1], [0, 0, 1, 1], [], []>} : vector<8x32xbf16>, vector<32x96xbf16>, vector<8x96xf32> -> vector<8x96xf32>
    %150 = vector.extract_strided_slice %145 {offsets = [0, 0], sizes = [1, 96], strides = [1, 1]} : vector<8x128xf32> to vector<1x96xf32>
    %151 = vector.broadcast %150 : vector<1x96xf32> to vector<8x96xf32>
    %152 = arith.addf %149, %151 : vector<8x96xf32>
    %153 = arith.truncf %152 : vector<8x96xf32> to vector<8x96xbf16>
    %154 = vector.extract_strided_slice %153 {offsets = [0, 0], sizes = [8, 16], strides = [1, 1]} : vector<8x96xbf16> to vector<8x16xbf16>
    %155 = vector.extract_strided_slice %153 {offsets = [0, 16], sizes = [8, 16], strides = [1, 1]} : vector<8x96xbf16> to vector<8x16xbf16>
    %156 = tpu.concatenate %154, %155 in 0 : vector<8x16xbf16>, vector<8x16xbf16> -> vector<16x16xbf16>
    %157 = vector.extract_strided_slice %153 {offsets = [0, 32], sizes = [8, 16], strides = [1, 1]} : vector<8x96xbf16> to vector<8x16xbf16>
    %158 = vector.extract_strided_slice %153 {offsets = [0, 48], sizes = [8, 16], strides = [1, 1]} : vector<8x96xbf16> to vector<8x16xbf16>
    %159 = tpu.concatenate %157, %158 in 0 : vector<8x16xbf16>, vector<8x16xbf16> -> vector<16x16xbf16>
    %160 = vector.extract_strided_slice %153 {offsets = [0, 64], sizes = [8, 16], strides = [1, 1]} : vector<8x96xbf16> to vector<8x16xbf16>
    %161 = vector.extract_strided_slice %153 {offsets = [0, 80], sizes = [8, 16], strides = [1, 1]} : vector<8x96xbf16> to vector<8x16xbf16>
    %162 = tpu.concatenate %160, %161 in 0 : vector<8x16xbf16>, vector<8x16xbf16> -> vector<16x16xbf16>
    %cst_55 = arith.constant dense<0.000000e+00> : vector<16x16xf32>
    %163 = tpu.matmul %156, %159, %cst_55 {dimension_numbers = #tpu.dot_dimension_numbers<[1], [1], [0], [0], [0, 0, 1, 0], [], []>} : vector<16x16xbf16>, vector<16x16xbf16>, vector<16x16xf32> -> vector<16x16xf32>
    %cst_56 = arith.constant 2.500000e-01 : f32
    %164 = vector.broadcast %cst_56 : f32 to vector<16x16xf32>
    %165 = arith.mulf %163, %164 : vector<16x16xf32>
    %166 = arith.addf %165, %2 : vector<16x16xf32>
    %cst_57 = arith.constant dense<0xFF800000> : vector<16xf32>
    %167 = vector.multi_reduction <maximumf>, %166, %cst_57 [1] : vector<16x16xf32> to vector<16xf32>
    %168 = vector.shape_cast %167 : vector<16xf32> to vector<16x1xf32>
    %169 = vector.broadcast %168 : vector<16x1xf32> to vector<16x16xf32>
    %170 = arith.subf %166, %169 : vector<16x16xf32>
    %171 = math.exp %170 : vector<16x16xf32>
    %cst_58 = arith.constant dense<0.000000e+00> : vector<16xf32>
    %172 = vector.multi_reduction <add>, %171, %cst_58 [1] : vector<16x16xf32> to vector<16xf32>
    %173 = vector.shape_cast %172 : vector<16xf32> to vector<16x1xf32>
    %174 = vector.broadcast %173 : vector<16x1xf32> to vector<16x16xf32>
    %175 = arith.divf %171, %174 : vector<16x16xf32>
    %176 = arith.truncf %175 : vector<16x16xf32> to vector<16x16xbf16>
    %cst_59 = arith.constant dense<0.000000e+00> : vector<16x16xf32>
    %177 = tpu.matmul %176, %162, %cst_59 {dimension_numbers = #tpu.dot_dimension_numbers<[1], [0], [0], [1], [0, 0, 1, 1], [], []>} : vector<16x16xbf16>, vector<16x16xbf16>, vector<16x16xf32> -> vector<16x16xf32>
    %178 = vector.extract_strided_slice %177 {offsets = [0, 0], sizes = [8, 16], strides = [1, 1]} : vector<16x16xf32> to vector<8x16xf32>
    %179 = vector.extract_strided_slice %177 {offsets = [8, 0], sizes = [8, 16], strides = [1, 1]} : vector<16x16xf32> to vector<8x16xf32>
    %180 = tpu.concatenate %178, %179 in 1 : vector<8x16xf32>, vector<8x16xf32> -> vector<8x32xf32>
    %181 = arith.truncf %180 : vector<8x32xf32> to vector<8x32xbf16>
    %c1_60 = arith.constant 1 : index
    %c0_61 = arith.constant 0 : index
    %c0_62 = arith.constant 0 : index
    %182 = vector.load %arg6[%c1_60, %c0_61, %c0_62] : memref<2x32x32xbf16, #tpu.memory_space<vmem>>, vector<1x32x32xbf16>
    %183 = vector.shape_cast %182 : vector<1x32x32xbf16> to vector<32x32xbf16>
    %cst_63 = arith.constant dense<0.000000e+00> : vector<8x32xf32>
    %184 = tpu.matmul %181, %183, %cst_63 {dimension_numbers = #tpu.dot_dimension_numbers<[1], [0], [0], [1], [0, 0, 1, 1], [], []>} : vector<8x32xbf16>, vector<32x32xbf16>, vector<8x32xf32> -> vector<8x32xf32>
    %185 = vector.extract_strided_slice %145 {offsets = [1, 0], sizes = [1, 32], strides = [1, 1]} : vector<8x128xf32> to vector<1x32xf32>
    %186 = vector.broadcast %185 : vector<1x32xf32> to vector<8x32xf32>
    %187 = arith.addf %184, %186 : vector<8x32xf32>
    %188 = arith.addf %187, %143 : vector<8x32xf32>
    %189 = vector.extract_strided_slice %145 {offsets = [2, 0], sizes = [1, 32], strides = [1, 1]} : vector<8x128xf32> to vector<1x32xf32>
    %190 = vector.extract_strided_slice %145 {offsets = [3, 0], sizes = [1, 32], strides = [1, 1]} : vector<8x128xf32> to vector<1x32xf32>
    %cst_64 = arith.constant dense<0.000000e+00> : vector<8xf32>
    %191 = vector.multi_reduction <add>, %188, %cst_64 [1] : vector<8x32xf32> to vector<8xf32>
    %192 = vector.shape_cast %191 : vector<8xf32> to vector<8x1xf32>
    %cst_65 = arith.constant 3.200000e+01 : f32
    %193 = vector.broadcast %cst_65 : f32 to vector<8x1xf32>
    %194 = arith.divf %192, %193 : vector<8x1xf32>
    %195 = vector.broadcast %194 : vector<8x1xf32> to vector<8x32xf32>
    %196 = arith.subf %188, %195 : vector<8x32xf32>
    %197 = arith.mulf %196, %196 : vector<8x32xf32>
    %cst_66 = arith.constant dense<0.000000e+00> : vector<8xf32>
    %198 = vector.multi_reduction <add>, %197, %cst_66 [1] : vector<8x32xf32> to vector<8xf32>
    %199 = vector.shape_cast %198 : vector<8xf32> to vector<8x1xf32>
    %cst_67 = arith.constant 3.200000e+01 : f32
    %200 = vector.broadcast %cst_67 : f32 to vector<8x1xf32>
    %201 = arith.divf %199, %200 : vector<8x1xf32>
    %cst_68 = arith.constant 9.99999996E-13 : f32
    %202 = vector.broadcast %cst_68 : f32 to vector<8x1xf32>
    %203 = arith.addf %201, %202 : vector<8x1xf32>
    %204 = math.rsqrt %203 : vector<8x1xf32>
    %205 = vector.broadcast %204 : vector<8x1xf32> to vector<8x32xf32>
    %206 = arith.mulf %196, %205 : vector<8x32xf32>
    %207 = vector.broadcast %189 : vector<1x32xf32> to vector<8x32xf32>
    %208 = arith.mulf %206, %207 : vector<8x32xf32>
    %209 = vector.broadcast %190 : vector<1x32xf32> to vector<8x32xf32>
    %210 = arith.addf %208, %209 : vector<8x32xf32>
    %211 = arith.truncf %210 : vector<8x32xf32> to vector<8x32xbf16>
    %c1_69 = arith.constant 1 : index
    %c0_70 = arith.constant 0 : index
    %c0_71 = arith.constant 0 : index
    %212 = vector.load %arg7[%c1_69, %c0_70, %c0_71] : memref<2x32x64xbf16, #tpu.memory_space<vmem>>, vector<1x32x64xbf16>
    %213 = vector.shape_cast %212 : vector<1x32x64xbf16> to vector<32x64xbf16>
    %cst_72 = arith.constant dense<0.000000e+00> : vector<8x64xf32>
    %214 = tpu.matmul %211, %213, %cst_72 {dimension_numbers = #tpu.dot_dimension_numbers<[1], [0], [0], [1], [0, 0, 1, 1], [], []>} : vector<8x32xbf16>, vector<32x64xbf16>, vector<8x64xf32> -> vector<8x64xf32>
    %215 = vector.extract_strided_slice %145 {offsets = [4, 0], sizes = [1, 64], strides = [1, 1]} : vector<8x128xf32> to vector<1x64xf32>
    %216 = vector.broadcast %215 : vector<1x64xf32> to vector<8x64xf32>
    %217 = arith.addf %214, %216 : vector<8x64xf32>
    %218 = arith.mulf %217, %217 : vector<8x64xf32>
    %219 = arith.mulf %217, %218 : vector<8x64xf32>
    %cst_73 = arith.constant 4.471500e-02 : f32
    %220 = vector.broadcast %cst_73 : f32 to vector<8x64xf32>
    %221 = arith.mulf %220, %219 : vector<8x64xf32>
    %222 = arith.addf %217, %221 : vector<8x64xf32>
    %cst_74 = arith.constant 0.797884583 : f32
    %223 = vector.broadcast %cst_74 : f32 to vector<8x64xf32>
    %224 = arith.mulf %223, %222 : vector<8x64xf32>
    %225 = math.tanh %224 : vector<8x64xf32>
    %cst_75 = arith.constant 1.000000e+00 : f32
    %226 = vector.broadcast %cst_75 : f32 to vector<8x64xf32>
    %227 = arith.addf %226, %225 : vector<8x64xf32>
    %cst_76 = arith.constant 5.000000e-01 : f32
    %228 = vector.broadcast %cst_76 : f32 to vector<8x64xf32>
    %229 = arith.mulf %228, %227 : vector<8x64xf32>
    %230 = arith.mulf %217, %229 : vector<8x64xf32>
    %231 = arith.truncf %230 : vector<8x64xf32> to vector<8x64xbf16>
    %c1_77 = arith.constant 1 : index
    %c0_78 = arith.constant 0 : index
    %c0_79 = arith.constant 0 : index
    %232 = vector.load %arg8[%c1_77, %c0_78, %c0_79] : memref<2x64x32xbf16, #tpu.memory_space<vmem>>, vector<1x64x32xbf16>
    %233 = vector.shape_cast %232 : vector<1x64x32xbf16> to vector<64x32xbf16>
    %cst_80 = arith.constant dense<0.000000e+00> : vector<8x32xf32>
    %234 = tpu.matmul %231, %233, %cst_80 {dimension_numbers = #tpu.dot_dimension_numbers<[1], [0], [0], [1], [0, 0, 1, 1], [], []>} : vector<8x64xbf16>, vector<64x32xbf16>, vector<8x32xf32> -> vector<8x32xf32>
    %235 = vector.extract_strided_slice %145 {offsets = [5, 0], sizes = [1, 32], strides = [1, 1]} : vector<8x128xf32> to vector<1x32xf32>
    %236 = vector.broadcast %235 : vector<1x32xf32> to vector<8x32xf32>
    %237 = arith.addf %234, %236 : vector<8x32xf32>
    %238 = arith.addf %237, %210 : vector<8x32xf32>
    %239 = vector.extract_strided_slice %145 {offsets = [6, 0], sizes = [1, 32], strides = [1, 1]} : vector<8x128xf32> to vector<1x32xf32>
    %240 = vector.extract_strided_slice %145 {offsets = [7, 0], sizes = [1, 32], strides = [1, 1]} : vector<8x128xf32> to vector<1x32xf32>
    %cst_81 = arith.constant dense<0.000000e+00> : vector<8xf32>
    %241 = vector.multi_reduction <add>, %238, %cst_81 [1] : vector<8x32xf32> to vector<8xf32>
    %242 = vector.shape_cast %241 : vector<8xf32> to vector<8x1xf32>
    %cst_82 = arith.constant 3.200000e+01 : f32
    %243 = vector.broadcast %cst_82 : f32 to vector<8x1xf32>
    %244 = arith.divf %242, %243 : vector<8x1xf32>
    %245 = vector.broadcast %244 : vector<8x1xf32> to vector<8x32xf32>
    %246 = arith.subf %238, %245 : vector<8x32xf32>
    %247 = arith.mulf %246, %246 : vector<8x32xf32>
    %cst_83 = arith.constant dense<0.000000e+00> : vector<8xf32>
    %248 = vector.multi_reduction <add>, %247, %cst_83 [1] : vector<8x32xf32> to vector<8xf32>
    %249 = vector.shape_cast %248 : vector<8xf32> to vector<8x1xf32>
    %cst_84 = arith.constant 3.200000e+01 : f32
    %250 = vector.broadcast %cst_84 : f32 to vector<8x1xf32>
    %251 = arith.divf %249, %250 : vector<8x1xf32>
    %cst_85 = arith.constant 9.99999996E-13 : f32
    %252 = vector.broadcast %cst_85 : f32 to vector<8x1xf32>
    %253 = arith.addf %251, %252 : vector<8x1xf32>
    %254 = math.rsqrt %253 : vector<8x1xf32>
    %255 = vector.broadcast %254 : vector<8x1xf32> to vector<8x32xf32>
    %256 = arith.mulf %246, %255 : vector<8x32xf32>
    %257 = vector.broadcast %239 : vector<1x32xf32> to vector<8x32xf32>
    %258 = arith.mulf %256, %257 : vector<8x32xf32>
    %259 = vector.broadcast %240 : vector<1x32xf32> to vector<8x32xf32>
    %260 = arith.addf %258, %259 : vector<8x32xf32>
    %261 = vector.extract_strided_slice %260 {offsets = [0, 0], sizes = [1, 32], strides = [1, 1]} : vector<8x32xf32> to vector<1x32xf32>
    %262 = arith.truncf %261 : vector<1x32xf32> to vector<1x32xbf16>
    %c0_86 = arith.constant 0 : index
    %c0_87 = arith.constant 0 : index
    %263 = vector.load %arg9[%c0_86, %c0_87] : memref<32x128xbf16, #tpu.memory_space<vmem>>, vector<32x128xbf16>
    %cst_88 = arith.constant dense<0.000000e+00> : vector<1x128xf32>
    %264 = tpu.matmul %262, %263, %cst_88 {dimension_numbers = #tpu.dot_dimension_numbers<[1], [0], [0], [1], [0, 0, 1, 1], [], []>} : vector<1x32xbf16>, vector<32x128xbf16>, vector<1x128xf32> -> vector<1x128xf32>
    %265 = vector.extract_strided_slice %0 {offsets = [2, 0], sizes = [1, 128], strides = [1, 1]} : vector<8x128xf32> to vector<1x128xf32>
    %266 = arith.addf %264, %265 : vector<1x128xf32>
    %267 = vector.shape_cast %266 : vector<1x128xf32> to vector<1x128xf32>
    %268 = vector.broadcast %267 : vector<1x128xf32> to vector<8x128xf32>
    %c0_89 = arith.constant 0 : index
    %c0_90 = arith.constant 0 : index
    %c0_91 = arith.constant 0 : index
    %269 = vector.load %arg10[%c0_89, %c0_90, %c0_91] : memref<1x8x128xf32, #tpu.memory_space<vmem>>, vector<1x8x128xf32>
    %270 = vector.shape_cast %269 : vector<1x8x128xf32> to vector<8x128xf32>
    %271 = vector.shape_cast %268 : vector<8x128xf32> to vector<1x8x128xf32>
    tpu.vector_store %arg10[%c0_89, %c0_90, %c0_91], %271 {strides = array<i32>} : memref<1x8x128xf32, #tpu.memory_space<vmem>>, vector<1x8x128xf32>,
    return
  }
  func.func @transform_0(%arg0: i32) -> (i32, i32, i32) {
    %c0_i32 = arith.constant 0 : i32
    %c0_i32_0 = arith.constant 0 : i32
    %c0_i32_1 = arith.constant 0 : i32
    return %arg0, %c0_i32, %c0_i32_0 : i32, i32, i32
  }
  func.func @transform_1(%arg0: i32) -> (i32, i32, i32) {
    %c0_i32 = arith.constant 0 : i32
    %c0_i32_0 = arith.constant 0 : i32
    %c0_i32_1 = arith.constant 0 : i32
    return %arg0, %c0_i32, %c0_i32_0 : i32, i32, i32
  }
  func.func @transform_2(%arg0: i32) -> (i32, i32) {
    %c0_i32 = arith.constant 0 : i32
    %c0_i32_0 = arith.constant 0 : i32
    %c0_i32_1 = arith.constant 0 : i32
    return %c0_i32, %c0_i32_0 : i32, i32
  }
  func.func @transform_3(%arg0: i32) -> (i32, i32, i32) {
    %c0_i32 = arith.constant 0 : i32
    %c0_i32_0 = arith.constant 0 : i32
    %c0_i32_1 = arith.constant 0 : i32
    %c0_i32_2 = arith.constant 0 : i32
    return %c0_i32, %c0_i32_0, %c0_i32_1 : i32, i32, i32
  }
  func.func @transform_4(%arg0: i32) -> (i32, i32, i32) {
    %c0_i32 = arith.constant 0 : i32
    %c0_i32_0 = arith.constant 0 : i32
    %c0_i32_1 = arith.constant 0 : i32
    %c0_i32_2 = arith.constant 0 : i32
    return %c0_i32, %c0_i32_0, %c0_i32_1 : i32, i32, i32
  }
  func.func @transform_5(%arg0: i32) -> (i32, i32, i32) {
    %c0_i32 = arith.constant 0 : i32
    %c0_i32_0 = arith.constant 0 : i32
    %c0_i32_1 = arith.constant 0 : i32
    %c0_i32_2 = arith.constant 0 : i32
    return %c0_i32, %c0_i32_0, %c0_i32_1 : i32, i32, i32
  }
  func.func @transform_6(%arg0: i32) -> (i32, i32, i32) {
    %c0_i32 = arith.constant 0 : i32
    %c0_i32_0 = arith.constant 0 : i32
    %c0_i32_1 = arith.constant 0 : i32
    %c0_i32_2 = arith.constant 0 : i32
    return %c0_i32, %c0_i32_0, %c0_i32_1 : i32, i32, i32
  }
  func.func @transform_7(%arg0: i32) -> (i32, i32, i32) {
    %c0_i32 = arith.constant 0 : i32
    %c0_i32_0 = arith.constant 0 : i32
    %c0_i32_1 = arith.constant 0 : i32
    %c0_i32_2 = arith.constant 0 : i32
    return %c0_i32, %c0_i32_0, %c0_i32_1 : i32, i32, i32
  }
  func.func @transform_8(%arg0: i32) -> (i32, i32) {
    %c0_i32 = arith.constant 0 : i32
    %c0_i32_0 = arith.constant 0 : i32
    %c0_i32_1 = arith.constant 0 : i32
    return %c0_i32, %c0_i32_0 : i32, i32
  }
  func.func @transform_9(%arg0: i32) -> (i32, i32, i32) {
    %c0_i32 = arith.constant 0 : i32
    %c0_i32_0 = arith.constant 0 : i32
    %c0_i32_1 = arith.constant 0 : i32
    return %arg0, %c0_i32, %c0_i32_0 : i32, i32, i32
  }
}

</mosaic_0001>

<llo_original>
// kernel: custom_bert_forward.1
$region0: #{custom_bert_forward.1}
  #allocation0 [shape = 'u32[]', space=smem, size = 0x4, offset = 0x4, fixed_abs, tag = 'smem constant byte address 0x4 - core index']
  #allocation1 [shape = 'u32[144,128]{1,0:T(1,128)}', space=vmem, size = 0x12000, scoped, tag = 'internal scratch']
  %s0 = inlined_call_operand.vmem [shape: f32[2,8,32], index: 0, kind: input, shape index: {}]
  %s1 = inlined_call_operand.vmem [shape: f32[2,16,16], index: 1, kind: input, shape index: {}]
  %s2 = inlined_call_operand.vmem [shape: f32[8,128], index: 2, kind: input, shape index: {}]
  %s3 = inlined_call_operand.vmem [shape: f32[2,8,128], index: 3, kind: input, shape index: {}]
  %s4 = inlined_call_operand.vmem [shape: bf16[2,32,96], index: 4, kind: input, shape index: {}]
  %s5 = inlined_call_operand.vmem [shape: bf16[2,32,32], index: 5, kind: input, shape index: {}]
  %s6 = inlined_call_operand.vmem [shape: bf16[2,32,64], index: 6, kind: input, shape index: {}]
  %s7 = inlined_call_operand.vmem [shape: bf16[2,64,32], index: 7, kind: input, shape index: {}]
  %s8 = inlined_call_operand.vmem [shape: bf16[32,128], index: 8, kind: input, shape index: {}]
  %s9 = inlined_call_operand.vmem [shape: f32[2,8,128], index: 9, kind: output, shape index: {}]
  %s10 = sld [smem:[#allocation0]]
  $region69: #{custom_bert_forward.1} parent=0
    _
  %s12 = ssub.s32 1, %s10
  %s13 = scalar_select 0, %s12, %s10
  loop: start=0, step=1, limit=4
  $region2: #{custom_bert_forward.1} parent=0 // loop_pre_header
    _
  $region3: #{custom_bert_forward.1} parent=0 // loop_header
    %s15 = sphi 0, %s19
    %p16 = scmp.ge.s32.totalorder %s15, 4
    %s25 = sphi 0, %s27
    %s28 = sphi 0, %s25
    %s29 = sphi 0, %s28
    %s45 = sphi 0, %s29
    %s51 = sphi 0, %s53
    %s54 = sphi 0, %s51
    %s55 = sphi 0, %s54
    %s71 = sphi 0, %s55
    %s75 = sphi 0, %s75
    %s77 = sphi 0, %s75
    %s78 = sphi 0, %s77
    %s92 = sphi 0, %s78
    %s96 = sphi 0, %s96
    %s98 = sphi 0, %s96
    %s99 = sphi 0, %s98
    %s113 = sphi 0, %s99
    %s117 = sphi 0, %s117
    %s119 = sphi 0, %s117
    %s120 = sphi 0, %s119
    %s134 = sphi 0, %s120
    %s138 = sphi 0, %s138
    %s140 = sphi 0, %s138
    %s141 = sphi 0, %s140
    %s155 = sphi 0, %s141
    %s159 = sphi 0, %s159
    %s161 = sphi 0, %s159
    %s162 = sphi 0, %s161
    %s176 = sphi 0, %s162
    %s180 = sphi 0, %s180
    %s182 = sphi 0, %s180
    %s183 = sphi 0, %s182
    %s197 = sphi 0, %s183
    %s201 = sphi 0, %s201
    %s203 = sphi 0, %s201
    %s204 = sphi 0, %s203
    %s218 = sphi 0, %s204
    %s224 = sphi 0, %s226
    %s227 = sphi 0, %s224
    %s228 = sphi 0, %s227
    %s244 = sphi 0, %s228
  $region4: #{custom_bert_forward.1} parent=0 // loop_header_branch
    %18 = sbr.rel (%p16) target = $region8
  $region5: #{custom_bert_forward.1} parent=0 // loop_body
    %s20 = ssub.s32 %s15, 1
    %s21 = ssub.s32 %s15, 2
    %s22 = sadd.s32 %s15, 1
    %s23 = ssub.s32 %s15, %s22
    %p24 = scmp.eq.s32.totalorder %s23, 0
    %s26 = sadd.s32 %s25, 1
    %s27 = scalar_select %p24, %s25, %s26
    %p30 = pneg %p24
    %p31 = scmp.eq.s32.totalorder %s15, 1
    %p32 = por %p30, %p31
    %p33 = scmp.ne.s32.totalorder %s25, %s28
    %p34 = scmp.eq.s32.totalorder %s15, 0
    %p35 = por %p33, %p34
    %p36 = scmp.ne.s32.totalorder %s25, %s28
    %p37 = scmp.eq.s32.totalorder %s20, 1
    %p38 = por %p36, %p37
    %p39 = scmp.ne.s32.totalorder %s28, %s29
    %p40 = scmp.eq.s32.totalorder %s20, 0
    %p41 = por %p39, %p40
    %p42 = scmp.ne.s32.totalorder %s28, %s29
    %p43 = scmp.eq.s32.totalorder %s21, 1
    %p44 = por %p42, %p43
    %p46 = scmp.ne.s32.totalorder %s29, %s45
    %p47 = scmp.eq.s32.totalorder %s21, 0
    %p48 = por %p46, %p47
    %s49 = ssub.s32 %s15, %s22
    %p50 = scmp.eq.s32.totalorder %s49, 0
    %s52 = sadd.s32 %s51, 1
    %s53 = scalar_select %p50, %s51, %s52
    %p56 = pneg %p50
    %p57 = scmp.eq.s32.totalorder %s15, 1
    %p58 = por %p56, %p57
    %p59 = scmp.ne.s32.totalorder %s51, %s54
    %p60 = scmp.eq.s32.totalorder %s15, 0
    %p61 = por %p59, %p60
    %p62 = scmp.ne.s32.totalorder %s51, %s54
    %p63 = scmp.eq.s32.totalorder %s20, 1
    %p64 = por %p62, %p63
    %p65 = scmp.ne.s32.totalorder %s54, %s55
    %p66 = scmp.eq.s32.totalorder %s20, 0
    %p67 = por %p65, %p66
    %p68 = scmp.ne.s32.totalorder %s54, %s55
    %p69 = scmp.eq.s32.totalorder %s21, 1
    %p70 = por %p68, %p69
    %p72 = scmp.ne.s32.totalorder %s55, %s71
    %p73 = scmp.eq.s32.totalorder %s21, 0
    %p74 = por %p72, %p73
    %s76 = sadd.s32 %s75, 1
    %p79 = scmp.eq.s32.totalorder %s15, 1
    %p80 = scmp.ne.s32.totalorder %s75, %s77
    %p81 = scmp.eq.s32.totalorder %s15, 0
    %p82 = por %p80, %p81
    %p83 = scmp.ne.s32.totalorder %s75, %s77
    %p84 = scmp.eq.s32.totalorder %s20, 1
    %p85 = por %p83, %p84
    %p86 = scmp.ne.s32.totalorder %s77, %s78
    %p87 = scmp.eq.s32.totalorder %s20, 0
    %p88 = por %p86, %p87
    %p89 = scmp.ne.s32.totalorder %s77, %s78
    %p90 = scmp.eq.s32.totalorder %s21, 1
    %p91 = por %p89, %p90
    %p93 = scmp.ne.s32.totalorder %s78, %s92
    %p94 = scmp.eq.s32.totalorder %s21, 0
    %p95 = por %p93, %p94
    %s97 = sadd.s32 %s96, 1
    %p100 = scmp.eq.s32.totalorder %s15, 1
    %p101 = scmp.ne.s32.totalorder %s96, %s98
    %p102 = scmp.eq.s32.totalorder %s15, 0
    %p103 = por %p101, %p102
    %p104 = scmp.ne.s32.totalorder %s96, %s98
    %p105 = scmp.eq.s32.totalorder %s20, 1
    %p106 = por %p104, %p105
    %p107 = scmp.ne.s32.totalorder %s98, %s99
    %p108 = scmp.eq.s32.totalorder %s20, 0
    %p109 = por %p107, %p108
    %p110 = scmp.ne.s32.totalorder %s98, %s99
    %p111 = scmp.eq.s32.totalorder %s21, 1
    %p112 = por %p110, %p111
    %p114 = scmp.ne.s32.totalorder %s99, %s113
    %p115 = scmp.eq.s32.totalorder %s21, 0
    %p116 = por %p114, %p115
    %s118 = sadd.s32 %s117, 1
    %p121 = scmp.eq.s32.totalorder %s15, 1
    %p122 = scmp.ne.s32.totalorder %s117, %s119
    %p123 = scmp.eq.s32.totalorder %s15, 0
    %p124 = por %p122, %p123
    %p125 = scmp.ne.s32.totalorder %s117, %s119
    %p126 = scmp.eq.s32.totalorder %s20, 1
    %p127 = por %p125, %p126
    %p128 = scmp.ne.s32.totalorder %s119, %s120
    %p129 = scmp.eq.s32.totalorder %s20, 0
    %p130 = por %p128, %p129
    %p131 = scmp.ne.s32.totalorder %s119, %s120
    %p132 = scmp.eq.s32.totalorder %s21, 1
    %p133 = por %p131, %p132
    %p135 = scmp.ne.s32.totalorder %s120, %s134
    %p136 = scmp.eq.s32.totalorder %s21, 0
    %p137 = por %p135, %p136
    %s139 = sadd.s32 %s138, 1
    %p142 = scmp.eq.s32.totalorder %s15, 1
    %p143 = scmp.ne.s32.totalorder %s138, %s140
    %p144 = scmp.eq.s32.totalorder %s15, 0
    %p145 = por %p143, %p144
    %p146 = scmp.ne.s32.totalorder %s138, %s140
    %p147 = scmp.eq.s32.totalorder %s20, 1
    %p148 = por %p146, %p147
    %p149 = scmp.ne.s32.totalorder %s140, %s141
    %p150 = scmp.eq.s32.totalorder %s20, 0
    %p151 = por %p149, %p150
    %p152 = scmp.ne.s32.totalorder %s140, %s141
    %p153 = scmp.eq.s32.totalorder %s21, 1
    %p154 = por %p152, %p153
    %p156 = scmp.ne.s32.totalorder %s141, %s155
    %p157 = scmp.eq.s32.totalorder %s21, 0
    %p158 = por %p156, %p157
    %s160 = sadd.s32 %s159, 1
    %p163 = scmp.eq.s32.totalorder %s15, 1
    %p164 = scmp.ne.s32.totalorder %s159, %s161
    %p165 = scmp.eq.s32.totalorder %s15, 0
    %p166 = por %p164, %p165
    %p167 = scmp.ne.s32.totalorder %s159, %s161
    %p168 = scmp.eq.s32.totalorder %s20, 1
    %p169 = por %p167, %p168
    %p170 = scmp.ne.s32.totalorder %s161, %s162
    %p171 = scmp.eq.s32.totalorder %s20, 0
    %p172 = por %p170, %p171
    %p173 = scmp.ne.s32.totalorder %s161, %s162
    %p174 = scmp.eq.s32.totalorder %s21, 1
    %p175 = por %p173, %p174
    %p177 = scmp.ne.s32.totalorder %s162, %s176
    %p178 = scmp.eq.s32.totalorder %s21, 0
    %p179 = por %p177, %p178
    %s181 = sadd.s32 %s180, 1
    %p184 = scmp.eq.s32.totalorder %s15, 1
    %p185 = scmp.ne.s32.totalorder %s180, %s182
    %p186 = scmp.eq.s32.totalorder %s15, 0
    %p187 = por %p185, %p186
    %p188 = scmp.ne.s32.totalorder %s180, %s182
    %p189 = scmp.eq.s32.totalorder %s20, 1
    %p190 = por %p188, %p189
    %p191 = scmp.ne.s32.totalorder %s182, %s183
    %p192 = scmp.eq.s32.totalorder %s20, 0
    %p193 = por %p191, %p192
    %p194 = scmp.ne.s32.totalorder %s182, %s183
    %p195 = scmp.eq.s32.totalorder %s21, 1
    %p196 = por %p194, %p195
    %p198 = scmp.ne.s32.totalorder %s183, %s197
    %p199 = scmp.eq.s32.totalorder %s21, 0
    %p200 = por %p198, %p199
    %s202 = sadd.s32 %s201, 1
    %p205 = scmp.eq.s32.totalorder %s15, 1
    %p206 = scmp.ne.s32.totalorder %s201, %s203
    %p207 = scmp.eq.s32.totalorder %s15, 0
    %p208 = por %p206, %p207
    %p209 = scmp.ne.s32.totalorder %s201, %s203
    %p210 = scmp.eq.s32.totalorder %s20, 1
    %p211 = por %p209, %p210
    %p212 = scmp.ne.s32.totalorder %s203, %s204
    %p213 = scmp.eq.s32.totalorder %s20, 0
    %p214 = por %p212, %p213
    %p215 = scmp.ne.s32.totalorder %s203, %s204
    %p216 = scmp.eq.s32.totalorder %s21, 1
    %p217 = por %p215, %p216
    %p219 = scmp.ne.s32.totalorder %s204, %s218
    %p220 = scmp.eq.s32.totalorder %s21, 0
    %p221 = por %p219, %p220
    %s222 = ssub.s32 %s15, %s22
    %p223 = scmp.eq.s32.totalorder %s222, 0
    %s225 = sadd.s32 %s224, 1
    %s226 = scalar_select %p223, %s224, %s225
    %p229 = pneg %p223
    %p230 = scmp.eq.s32.totalorder %s15, 1
    %p231 = por %p229, %p230
    %p232 = scmp.ne.s32.totalorder %s224, %s227
    %p233 = scmp.eq.s32.totalorder %s15, 0
    %p234 = por %p232, %p233
    %p235 = scmp.ne.s32.totalorder %s224, %s227
    %p236 = scmp.eq.s32.totalorder %s20, 1
    %p237 = por %p235, %p236
    %p238 = scmp.ne.s32.totalorder %s227, %s228
    %p239 = scmp.eq.s32.totalorder %s20, 0
    %p240 = por %p238, %p239
    %p241 = scmp.ne.s32.totalorder %s227, %s228
    %p242 = scmp.eq.s32.totalorder %s21, 1
    %p243 = por %p241, %p242
    %p245 = scmp.ne.s32.totalorder %s228, %s244
    %p246 = scmp.eq.s32.totalorder %s21, 0
    %p247 = por %p245, %p246
    %p248 = scmp.le.s32.totalorder 1, %s15
    %p249 = scmp.lt.s32.totalorder %s15, 3
    %p250 = pnand %p248, %p249
    %p251 = pneg %p250
    // Predicated region
    $region9: #{custom_bert_forward.1} parent=5 // pred_check
      _
    $region10: #{custom_bert_forward.1} parent=5 // pred_check_branch
      %253 = sbr.rel (%p250) target = $region12
    $region11: #{custom_bert_forward.1} parent=5 // pred_region
      %s254 = ssub.s32 %s15, 1
      // Predicated region
      $region13: #{custom_bert_forward.1} parent=11 // pred_check
        %p255 = pneg %p88
      $region14: #{custom_bert_forward.1} parent=11 // pred_check_branch
        %257 = sbr.rel (%p255) target = $region16
      $region15: #{custom_bert_forward.1} parent=11 // pred_region
        _
      $region16: #{custom_bert_forward.1} parent=11 // pred_fallthru
        _
      // Predicated region
      $region17: #{custom_bert_forward.1} parent=11 // pred_check
        %p258 = pneg %p109
      $region18: #{custom_bert_forward.1} parent=11 // pred_check_branch
        %260 = sbr.rel (%p258) target = $region20
      $region19: #{custom_bert_forward.1} parent=11 // pred_region
        _
      $region20: #{custom_bert_forward.1} parent=11 // pred_fallthru
        _
      // Predicated region
      $region21: #{custom_bert_forward.1} parent=11 // pred_check
        %p261 = pneg %p130
      $region22: #{custom_bert_forward.1} parent=11 // pred_check_branch
        %263 = sbr.rel (%p261) target = $region24
      $region23: #{custom_bert_forward.1} parent=11 // pred_region
        _
      $region24: #{custom_bert_forward.1} parent=11 // pred_fallthru
        _
      // Predicated region
      $region25: #{custom_bert_forward.1} parent=11 // pred_check
        %p264 = pneg %p151
      $region26: #{custom_bert_forward.1} parent=11 // pred_check_branch
        %266 = sbr.rel (%p264) target = $region28
      $region27: #{custom_bert_forward.1} parent=11 // pred_region
        _
      $region28: #{custom_bert_forward.1} parent=11 // pred_fallthru
        _
      // Predicated region
      $region29: #{custom_bert_forward.1} parent=11 // pred_check
        %p267 = pneg %p172
      $region30: #{custom_bert_forward.1} parent=11 // pred_check_branch
        %269 = sbr.rel (%p267) target = $region32
      $region31: #{custom_bert_forward.1} parent=11 // pred_region
        _
      $region32: #{custom_bert_forward.1} parent=11 // pred_fallthru
        _
      // Predicated region
      $region33: #{custom_bert_forward.1} parent=11 // pred_check
        %p270 = pneg %p193
      $region34: #{custom_bert_forward.1} parent=11 // pred_check_branch
        %272 = sbr.rel (%p270) target = $region36
      $region35: #{custom_bert_forward.1} parent=11 // pred_region
        _
      $region36: #{custom_bert_forward.1} parent=11 // pred_fallthru
        _
      // Predicated region
      $region37: #{custom_bert_forward.1} parent=11 // pred_check
        %p273 = pneg %p214
      $region38: #{custom_bert_forward.1} parent=11 // pred_check_branch
        %275 = sbr.rel (%p273) target = $region40
      $region39: #{custom_bert_forward.1} parent=11 // pred_region
        _
      $region40: #{custom_bert_forward.1} parent=11 // pred_fallthru
        _
    $region12: #{custom_bert_forward.1} parent=5 // pred_fallthru
      _
    %p276 = scmp.lt.s32.totalorder %s15, 2
    // Predicated region
    $region41: #{custom_bert_forward.1} parent=5 // pred_check
      %p277 = pneg %p276
    $region42: #{custom_bert_forward.1} parent=5 // pred_check_branch
      %279 = sbr.rel (%p277) target = $region44
    $region43: #{custom_bert_forward.1} parent=5 // pred_region
      // Predicated region
      $region45: #{custom_bert_forward.1} parent=43 // pred_check
        %p280 = pneg %p35
      $region46: #{custom_bert_forward.1} parent=43 // pred_check_branch
        %282 = sbr.rel (%p280) target = $region48
      $region47: #{custom_bert_forward.1} parent=43 // pred_region
        %p283 = scmp.lt.s32.totalorder %s15, 1
        %s284 = scalar_select %p283, %s15, 1
        %s285 = smul.addr %s284, 8
        %s286 = scalar_lea.vmem %s0, %s285
      $region48: #{custom_bert_forward.1} parent=43 // pred_fallthru
        _
      // Predicated region
      $region49: #{custom_bert_forward.1} parent=43 // pred_check
        %p287 = pneg %p61
      $region50: #{custom_bert_forward.1} parent=43 // pred_check_branch
        %289 = sbr.rel (%p287) target = $region52
      $region51: #{custom_bert_forward.1} parent=43 // pred_region
        %p290 = scmp.lt.s32.totalorder %s15, 1
        %s291 = scalar_select %p290, %s15, 1
        %s292 = smul.addr %s291, 2
        %s293 = smul.addr %s292, 8
        %s294 = scalar_lea.vmem %s1, %s293
      $region52: #{custom_bert_forward.1} parent=43 // pred_fallthru
        _
    $region44: #{custom_bert_forward.1} parent=5 // pred_fallthru
      _
    %p295 = scmp.le.s32.totalorder 1, %s15
    %p296 = scmp.lt.s32.totalorder %s15, 3
    %p297 = pnand %p295, %p296
    %p298 = pneg %p297
    // Predicated region
    $region53: #{custom_bert_forward.1} parent=5 // pred_check
      _
    $region54: #{custom_bert_forward.1} parent=5 // pred_check_branch
      %300 = sbr.rel (%p297) target = $region56
    $region55: #{custom_bert_forward.1} parent=5 // pred_region
      %s301 = ssub.s32 %s15, 1
      %p302 = scmp.lt.s32.totalorder %s20, 1
      %s303 = scalar_select %p302, %s20, 1
      %s304 = smul.addr %s303, 8
      %s305 = scalar_lea.vmem %s0, %s304
      %p306 = pneg %p41
      %p307 = pneg %p38
      %p308 = scmp.lt.s32.totalorder %s20, 1
      %s309 = scalar_select %p308, %s20, 1
      %s310 = smul.addr %s309, 2
      %s311 = smul.addr %s310, 8
      %s312 = scalar_lea.vmem %s1, %s311
      %p313 = pneg %p67
      %p314 = pneg %p64
      %p315 = pneg %p88
      %p316 = pneg %p85
      %p317 = pneg %p109
      %p318 = pneg %p106
      %p319 = pneg %p130
      %p320 = pneg %p127
      %p321 = pneg %p151
      %p322 = pneg %p148
      %p323 = pneg %p172
      %p324 = pneg %p169
      %p325 = pneg %p193
      %p326 = pneg %p190
      %p327 = pneg %p214
      %p328 = pneg %p211
      %p329 = pneg %p240
      %p330 = pneg %p237
      %p331 = scmp.lt.s32.totalorder %s20, 1
      %s332 = scalar_select %p331, %s20, 1
      %s333 = smul.addr %s332, 8
      %s334 = scalar_lea.vmem %s9, %s333
      %p335 = scmp.lt.s32.totalorder %s20, 1
      %s336 = scalar_select %p335, %s20, 1
      %s337 = smul.addr %s336, 8
      %s338 = scalar_lea.vmem %s0, %s337
      %p339 = scmp.lt.s32.totalorder %s20, 1
      %s340 = scalar_select %p339, %s20, 1
      %s341 = smul.addr %s340, 2
      %s342 = smul.addr %s341, 8
      %s343 = scalar_lea.vmem %s1, %s342
      %p344 = scmp.lt.s32.totalorder %s20, 1
      %s345 = scalar_select %p344, %s20, 1
      %s346 = smul.addr %s345, 8
      %s347 = scalar_lea.vmem %s9, %s346
      %v349 = vld [vmem:[%s2] sm:$0xff]
      %v350 = vld [vmem:[%s343] sm:$0xff]
      %v351 = vld [vmem:[%s343 + $0x8] sm:$0xff]
      %v352 = vld [vmem:[%s338] sm:$0xff]
      %vm353 = vcmask 261120
      %v354 = vsel %vm353, %v352, 0.0
      %355 = vadd.xlane.f32.xlu0 %v354
      %v356 = vpop.xlane.xlu0 %355
      %v357 = vrcp.pop 32.0
      %v358 = vmul.f32 %v356, %v357
      %v359 = vsub.f32 %v352, %v358
      %v360 = vmul.f32 %v359, %v359
      %v361 = vsel %vm353, %v360, 0.0
      %362 = vadd.xlane.f32.xlu0 %v361
      %v363 = vpop.xlane.xlu0 %362
      %v364 = vmul.f32 %v363, %v357
      %v365 = vadd.f32 %v364, 1e-12
      %v366 = vrsqrt.pop %v365
      %v367 = vmul.f32 %v359, %v366
      %v368 = vlaneseq
      %v369 = vshrl.u32 %v368, 7
      %v370 = vsub.s32 0, %v369
      %v371 = vrot.slane %v349, %v370
      %v372 = vmul.f32 %v367, %v371
      %v373 = vlaneseq
      %v374 = vshrl.u32 %v373, 7
      %v375 = vsub.s32 1, %v374
      %v376 = vrot.slane %v349, %v375
      %v377 = vadd.f32 %v372, %v376
      %v378 = vld [vmem:[%s3] sm:$0xff]
      %v379 = vpack.c.bf16 %v377, %v377
      %v380 = vld [vmem:[%s4] sm:$0xf]
      %v381 = vld [vmem:[%s4 + $0x4] sm:$0xf]
      %v382 = vld [vmem:[%s4 + $0x8] sm:$0xf]
      %v383 = vld [vmem:[%s4 + $0xc] sm:$0xf]
      %v384 = vlaneseq
      %v385 = vshrl.u32 %v384, 7
      %v386 = vsub.s32 0, %v385
      %v387 = vrot.slane %v378, %v386
      %v392 = vunpack.c.l.b16 %v380
      %v393 = vunpack.c.l.b16 %v381
      %v394 = vunpack.c.l.b16 %v382
      %v395 = vunpack.c.l.b16 %v383
      %v396 = vpack.c.b16 %v393, %v392
      %v397 = vpack.c.b16 %v395, %v394
      %v401 = vsel %vm353, %v379, 0
      %403 = vmatprep.subr.bf16.mxu0 0
      %404 = vmatpush1.bf16.msra.mxu0 %v396
      %405 = vmatprep.subr.bf16.mxu0 0
      %406 = vmatpush1.bf16.msra.mxu0 %v397
      %407 = vmatprep.subr.bf16.mxu0 0
      %408 = vmatpush1.bf16.msra.mxu0 0
      %409 = vmatprep.subr.bf16.mxu0 0
      %410 = vmatpush1.bf16.msra.mxu0 0
      %411 = vmatprep.subr.bf16.mxu0 0
      %412 = vmatpush1.bf16.msra.mxu0 0
      %413 = vmatprep.subr.bf16.mxu0 0
      %414 = vmatpush1.bf16.msra.mxu0 0
      %415 = vmatprep.subr.bf16.mxu0 0
      %416 = vmatpush1.bf16.msra.mxu0 0
      %417 = vmatprep.subr.bf16.mxu0 0
      %418 = vmatpush1.bf16.msra.mxu0 0
      %419 = vmatprep.subr.bf16.mxu0 0
      %420 = vmatpush1.bf16.msra.mxu0 0
      %421 = vmatprep.subr.bf16.mxu0 0
      %422 = vmatpush1.bf16.msra.mxu0 0
      %423 = vmatprep.subr.bf16.mxu0 0
      %424 = vmatpush1.bf16.msra.mxu0 0
      %425 = vmatprep.subr.bf16.mxu0 0
      %426 = vmatpush1.bf16.msra.mxu0 0
      %427 = vmatprep.subr.bf16.mxu0 0
      %428 = vmatpush1.bf16.msra.mxu0 0
      %429 = vmatprep.subr.bf16.mxu0 0
      %430 = vmatpush1.bf16.msra.mxu0 0
      %431 = vmatprep.subr.bf16.mxu0 0
      %432 = vmatpush1.bf16.msra.mxu0 0
      %433 = vmatprep.subr.bf16.mxu0 0
      %434 = vmatpush1.bf16.msra.mxu0 0
      %435 = vmatprep.mubr.bf16.mxu0 0
      %436 = vmatmul.mubr.bf16.gmra.mrb[0].mxu0 %v401
      %v437 = vpop.f32.mrb[0].mxu0
      %v438 = vadd.f32 %v387, %v437
      %v439 = vpop.f32.mrb[0].mxu0
      %v440 = vpop.f32.mrb[0].mxu0
      %v441 = vpop.f32.mrb[0].mxu0
      %442 = vdwg.mxu0
      %v443 = vpack.c.bf16 %v438, %v438
      %v445 = vrot.slane %v443, 4
      %446 = vrot.lane.b32.xlu0 %v445, 112
      %v447 = vpop.permute.xlu0 %446
      %vm448 = vcmask 1043456
      %v451 = vsel %vm448, %v443, %v447
      %453 = vrot.lane.b32.xlu0 %v451, 96
      %v454 = vpop.permute.xlu0 %453
      %vm455 = vcmask 130048
      %v456 = vsel %vm455, %v451, 0
      %v459 = vsel %vm455, %v454, 0
      %461 = vmatprep.subr.bf16.mxu0 0
      %462 = vmatpush1.bf16.xpose.msra.mxu0 %v459
      %463 = vmatprep.subr.bf16.mxu0 0
      %464 = vmatpush1.bf16.xpose.msra.mxu0 0
      %465 = vmatprep.subr.bf16.mxu0 0
      %466 = vmatpush1.bf16.xpose.msra.mxu0 0
      %467 = vmatprep.subr.bf16.mxu0 0
      %468 = vmatpush1.bf16.xpose.msra.mxu0 0
      %469 = vmatprep.subr.bf16.mxu0 0
      %470 = vmatpush1.bf16.xpose.msra.mxu0 0
      %471 = vmatprep.subr.bf16.mxu0 0
      %472 = vmatpush1.bf16.xpose.msra.mxu0 0
      %473 = vmatprep.subr.bf16.mxu0 0
      %474 = vmatpush1.bf16.xpose.msra.mxu0 0
      %475 = vmatprep.subr.bf16.mxu0 0
      %476 = vmatpush1.bf16.xpose.msra.mxu0 0
      %477 = vmatprep.subr.bf16.mxu0 0
      %478 = vmatpush1.bf16.xpose.msra.mxu0 0
      %479 = vmatprep.subr.bf16.mxu0 0
      %480 = vmatpush1.bf16.xpose.msra.mxu0 0
      %481 = vmatprep.subr.bf16.mxu0 0
      %482 = vmatpush1.bf16.xpose.msra.mxu0 0
      %483 = vmatprep.subr.bf16.mxu0 0
      %484 = vmatpush1.bf16.xpose.msra.mxu0 0
      %485 = vmatprep.subr.bf16.mxu0 0
      %486 = vmatpush1.bf16.xpose.msra.mxu0 0
      %487 = vmatprep.subr.bf16.mxu0 0
      %488 = vmatpush1.bf16.xpose.msra.mxu0 0
      %489 = vmatprep.subr.bf16.mxu0 0
      %490 = vmatpush1.bf16.xpose.msra.mxu0 0
      %491 = vmatprep.subr.bf16.mxu0 0
      %492 = vmatpush1.bf16.xpose.msra.mxu0 0
      %493 = vmatprep.mubr.bf16.mxu0 0
      %494 = vmatmul.mubr.bf16.gmra.mrb[0].mxu0 %v456
      %v495 = vpop.f32.mrb[0].mxu0
      %v496 = vadd.f32 0.0, %v495
      %v497 = vpop.f32.mrb[0].mxu0
      %v498 = vpop.f32.mrb[0].mxu0
      %v499 = vadd.f32 0.0, %v498
      %v500 = vpop.f32.mrb[0].mxu0
      %501 = vdwg.mxu0
      %v502 = vmul.f32 %v496, 0.25
      %v503 = vmul.f32 %v499, 0.25
      %v504 = vadd.f32 %v502, %v350
      %v505 = vadd.f32 %v503, %v351
      %v506 = vsel %vm455, %v504, -inf
      %507 = vmax.xlane.f32.xlu0 %v506
      %v508 = vpop.xlane.xlu0 %507
      %v509 = vsel %vm455, %v505, -inf
      %510 = vmax.xlane.f32.xlu0 %v509
      %v511 = vpop.xlane.xlu0 %510
      %v512 = vsub.f32 %v504, %v508
      %v513 = vsub.f32 %v505, %v511
      %v514 = vmul.f32 %v512, 1.442695
      %v515 = vpow.pop %v514
      %v516 = vmul.f32 %v513, 1.442695
      %v517 = vpow.pop %v516
      %v518 = vsel %vm455, %v515, 0.0
      %519 = vadd.xlane.f32.xlu0 %v518
      %v520 = vpop.xlane.xlu0 %519
      %v521 = vsel %vm455, %v517, 0.0
      %522 = vadd.xlane.f32.xlu0 %v521
      %v523 = vpop.xlane.xlu0 %522
      %v524 = vrcp.pop %v520
      %v525 = vmul.f32 %v515, %v524
      %v526 = vrcp.pop %v523
      %v527 = vmul.f32 %v517, %v526
      %v528 = vpack.c.bf16 %v527, %v525
      %529 = vrot.lane.b32.xlu0 %v451, 64
      %v530 = vpop.permute.xlu0 %529
      %v533 = vsel %vm455, %v528, 0
      %535 = vmatprep.subr.bf16.mxu0 0
      %536 = vmatpush1.bf16.msra.mxu0 %v530
      %537 = vmatprep.subr.bf16.mxu0 0
      %538 = vmatpush1.bf16.msra.mxu0 0
      %539 = vmatprep.subr.bf16.mxu0 0
      %540 = vmatpush1.bf16.msra.mxu0 0
      %541 = vmatprep.subr.bf16.mxu0 0
      %542 = vmatpush1.bf16.msra.mxu0 0
      %543 = vmatprep.subr.bf16.mxu0 0
      %544 = vmatpush1.bf16.msra.mxu0 0
      %545 = vmatprep.subr.bf16.mxu0 0
      %546 = vmatpush1.bf16.msra.mxu0 0
      %547 = vmatprep.subr.bf16.mxu0 0
      %548 = vmatpush1.bf16.msra.mxu0 0
      %549 = vmatprep.subr.bf16.mxu0 0
      %550 = vmatpush1.bf16.msra.mxu0 0
      %551 = vmatprep.subr.bf16.mxu0 0
      %552 = vmatpush1.bf16.msra.mxu0 0
      %553 = vmatprep.subr.bf16.mxu0 0
      %554 = vmatpush1.bf16.msra.mxu0 0
      %555 = vmatprep.subr.bf16.mxu0 0
      %556 = vmatpush1.bf16.msra.mxu0 0
      %557 = vmatprep.subr.bf16.mxu0 0
      %558 = vmatpush1.bf16.msra.mxu0 0
      %559 = vmatprep.subr.bf16.mxu0 0
      %560 = vmatpush1.bf16.msra.mxu0 0
      %561 = vmatprep.subr.bf16.mxu0 0
      %562 = vmatpush1.bf16.msra.mxu0 0
      %563 = vmatprep.subr.bf16.mxu0 0
      %564 = vmatpush1.bf16.msra.mxu0 0
      %565 = vmatprep.subr.bf16.mxu0 0
      %566 = vmatpush1.bf16.msra.mxu0 0
      %567 = vmatprep.mubr.bf16.mxu0 0
      %568 = vmatmul.mubr.bf16.gmra.mrb[0].mxu0 %v533
      %v569 = vpop.f32.mrb[0].mxu0
      %v570 = vadd.f32 0.0, %v569
      %v571 = vpop.f32.mrb[0].mxu0
      %v572 = vpop.f32.mrb[0].mxu0
      %v573 = vadd.f32 0.0, %v572
      %v574 = vpop.f32.mrb[0].mxu0
      %575 = vdwg.mxu0
      %577 = vrot.lane.b32.xlu0 %v573, 16
      %v578 = vpop.permute.xlu0 %577
      %v580 = vsel %vm455, %v570, %v578
      %v581 = vpack.c.bf16 %v580, %v580
      %v582 = vld [vmem:[%s5] sm:$0xf]
      %v583 = vld [vmem:[%s5 + $0x4] sm:$0xf]
      %v584 = vld [vmem:[%s5 + $0x8] sm:$0xf]
      %v585 = vld [vmem:[%s5 + $0xc] sm:$0xf]
      %v586 = vlaneseq
      %v587 = vshrl.u32 %v586, 7
      %v588 = vsub.s32 1, %v587
      %v589 = vrot.slane %v378, %v588
      %v594 = vunpack.c.l.b16 %v582
      %v595 = vunpack.c.l.b16 %v583
      %v596 = vunpack.c.l.b16 %v584
      %v597 = vunpack.c.l.b16 %v585
      %v598 = vpack.c.b16 %v595, %v594
      %v599 = vpack.c.b16 %v597, %v596
      %v603 = vsel %vm353, %v581, 0
      %605 = vmatprep.subr.bf16.mxu0 0
      %606 = vmatpush1.bf16.msra.mxu0 %v598
      %607 = vmatprep.subr.bf16.mxu0 0
      %608 = vmatpush1.bf16.msra.mxu0 %v599
      %609 = vmatprep.subr.bf16.mxu0 0
      %610 = vmatpush1.bf16.msra.mxu0 0
      %611 = vmatprep.subr.bf16.mxu0 0
      %612 = vmatpush1.bf16.msra.mxu0 0
      %613 = vmatprep.subr.bf16.mxu0 0
      %614 = vmatpush1.bf16.msra.mxu0 0
      %615 = vmatprep.subr.bf16.mxu0 0
      %616 = vmatpush1.bf16.msra.mxu0 0
      %617 = vmatprep.subr.bf16.mxu0 0
      %618 = vmatpush1.bf16.msra.mxu0 0
      %619 = vmatprep.subr.bf16.mxu0 0
      %620 = vmatpush1.bf16.msra.mxu0 0
      %621 = vmatprep.subr.bf16.mxu0 0
      %622 = vmatpush1.bf16.msra.mxu0 0
      %623 = vmatprep.subr.bf16.mxu0 0
      %624 = vmatpush1.bf16.msra.mxu0 0
      %625 = vmatprep.subr.bf16.mxu0 0
      %626 = vmatpush1.bf16.msra.mxu0 0
      %627 = vmatprep.subr.bf16.mxu0 0
      %628 = vmatpush1.bf16.msra.mxu0 0
      %629 = vmatprep.subr.bf16.mxu0 0
      %630 = vmatpush1.bf16.msra.mxu0 0
      %631 = vmatprep.subr.bf16.mxu0 0
      %632 = vmatpush1.bf16.msra.mxu0 0
      %633 = vmatprep.subr.bf16.mxu0 0
      %634 = vmatpush1.bf16.msra.mxu0 0
      %635 = vmatprep.subr.bf16.mxu0 0
      %636 = vmatpush1.bf16.msra.mxu0 0
      %637 = vmatprep.mubr.bf16.mxu0 0
      %638 = vmatmul.mubr.bf16.gmra.mrb[0].mxu0 %v603
      %v639 = vpop.f32.mrb[0].mxu0
      %v640 = vadd.f32 %v589, %v639
      %v641 = vpop.f32.mrb[0].mxu0
      %v642 = vpop.f32.mrb[0].mxu0
      %v643 = vpop.f32.mrb[0].mxu0
      %644 = vdwg.mxu0
      %v645 = vadd.f32 %v640, %v377
      %v646 = vsel %vm353, %v645, 0.0
      %647 = vadd.xlane.f32.xlu0 %v646
      %v648 = vpop.xlane.xlu0 %647
      %v649 = vmul.f32 %v648, %v357
      %v650 = vsub.f32 %v645, %v649
      %v651 = vmul.f32 %v650, %v650
      %v652 = vsel %vm353, %v651, 0.0
      %653 = vadd.xlane.f32.xlu0 %v652
      %v654 = vpop.xlane.xlu0 %653
      %v655 = vmul.f32 %v654, %v357
      %v656 = vadd.f32 %v655, 1e-12
      %v657 = vrsqrt.pop %v656
      %v658 = vmul.f32 %v650, %v657
      %v659 = vlaneseq
      %v660 = vshrl.u32 %v659, 7
      %v661 = vsub.s32 2, %v660
      %v662 = vrot.slane %v378, %v661
      %v663 = vmul.f32 %v658, %v662
      %v664 = vlaneseq
      %v665 = vshrl.u32 %v664, 7
      %v666 = vsub.s32 3, %v665
      %v667 = vrot.slane %v378, %v666
      %v668 = vadd.f32 %v663, %v667
      %v669 = vpack.c.bf16 %v668, %v668
      %v670 = vld [vmem:[%s6] sm:$0xf]
      %v671 = vld [vmem:[%s6 + $0x4] sm:$0xf]
      %v672 = vld [vmem:[%s6 + $0x8] sm:$0xf]
      %v673 = vld [vmem:[%s6 + $0xc] sm:$0xf]
      %v674 = vlaneseq
      %v675 = vshrl.u32 %v674, 7
      %v676 = vsub.s32 4, %v675
      %v677 = vrot.slane %v378, %v676
      %v682 = vunpack.c.l.b16 %v670
      %v683 = vunpack.c.l.b16 %v671
      %v684 = vunpack.c.l.b16 %v672
      %v685 = vunpack.c.l.b16 %v673
      %v686 = vpack.c.b16 %v683, %v682
      %v687 = vpack.c.b16 %v685, %v684
      %v691 = vsel %vm353, %v669, 0
      %693 = vmatprep.subr.bf16.mxu0 0
      %694 = vmatpush1.bf16.msra.mxu0 %v686
      %695 = vmatprep.subr.bf16.mxu0 0
      %696 = vmatpush1.bf16.msra.mxu0 %v687
      %697 = vmatprep.subr.bf16.mxu0 0
      %698 = vmatpush1.bf16.msra.mxu0 0
      %699 = vmatprep.subr.bf16.mxu0 0
      %700 = vmatpush1.bf16.msra.mxu0 0
      %701 = vmatprep.subr.bf16.mxu0 0
      %702 = vmatpush1.bf16.msra.mxu0 0
      %703 = vmatprep.subr.bf16.mxu0 0
      %704 = vmatpush1.bf16.msra.mxu0 0
      %705 = vmatprep.subr.bf16.mxu0 0
      %706 = vmatpush1.bf16.msra.mxu0 0
      %707 = vmatprep.subr.bf16.mxu0 0
      %708 = vmatpush1.bf16.msra.mxu0 0
      %709 = vmatprep.subr.bf16.mxu0 0
      %710 = vmatpush1.bf16.msra.mxu0 0
      %711 = vmatprep.subr.bf16.mxu0 0
      %712 = vmatpush1.bf16.msra.mxu0 0
      %713 = vmatprep.subr.bf16.mxu0 0
      %714 = vmatpush1.bf16.msra.mxu0 0
      %715 = vmatprep.subr.bf16.mxu0 0
      %716 = vmatpush1.bf16.msra.mxu0 0
      %717 = vmatprep.subr.bf16.mxu0 0
      %718 = vmatpush1.bf16.msra.mxu0 0
      %719 = vmatprep.subr.bf16.mxu0 0
      %720 = vmatpush1.bf16.msra.mxu0 0
      %721 = vmatprep.subr.bf16.mxu0 0
      %722 = vmatpush1.bf16.msra.mxu0 0
      %723 = vmatprep.subr.bf16.mxu0 0
      %724 = vmatpush1.bf16.msra.mxu0 0
      %725 = vmatprep.mubr.bf16.mxu0 0
      %726 = vmatmul.mubr.bf16.gmra.mrb[0].mxu0 %v691
      %v727 = vpop.f32.mrb[0].mxu0
      %v728 = vadd.f32 %v677, %v727
      %v729 = vpop.f32.mrb[0].mxu0
      %v730 = vpop.f32.mrb[0].mxu0
      %v731 = vpop.f32.mrb[0].mxu0
      %732 = vdwg.mxu0
      %v733 = vmul.f32 %v728, %v728
      %v734 = vmul.f32 %v728, %v733
      %v735 = vmul.f32 %v734, 0.044715
      %v736 = vadd.f32 %v728, %v735
      %v737 = vmul.f32 %v736, 0.7978846
      %v738 = vtanh.pop %v737
      %v739 = vadd.f32 %v738, 1.0
      %v740 = vmul.f32 %v739, 0.5
      %v741 = vmul.f32 %v728, %v740
      %v742 = vpack.c.bf16 %v741, %v741
      %v743 = vld [vmem:[%s7] sm:$0xf]
      %v744 = vld [vmem:[%s7 + $0x4] sm:$0xf]
      %v745 = vld [vmem:[%s7 + $0x8] sm:$0xf]
      %v746 = vld [vmem:[%s7 + $0xc] sm:$0xf]
      %v747 = vld [vmem:[%s7 + $0x10] sm:$0xf]
      %v748 = vld [vmem:[%s7 + $0x14] sm:$0xf]
      %v749 = vld [vmem:[%s7 + $0x18] sm:$0xf]
      %v750 = vld [vmem:[%s7 + $0x1c] sm:$0xf]
      %v751 = vlaneseq
      %v752 = vshrl.u32 %v751, 7
      %v753 = vsub.s32 5, %v752
      %v754 = vrot.slane %v378, %v753
      %v763 = vunpack.c.l.b16 %v743
      %v764 = vunpack.c.l.b16 %v744
      %v765 = vunpack.c.l.b16 %v745
      %v766 = vunpack.c.l.b16 %v746
      %v767 = vunpack.c.l.b16 %v747
      %v768 = vunpack.c.l.b16 %v748
      %v769 = vunpack.c.l.b16 %v749
      %v770 = vunpack.c.l.b16 %v750
      %v771 = vpack.c.b16 %v764, %v763
      %v772 = vpack.c.b16 %v766, %v765
      %v773 = vpack.c.b16 %v768, %v767
      %v774 = vpack.c.b16 %v770, %v769
      %vm779 = vcmask 523264
      %v781 = vsel %vm779, %v742, 0
      %783 = vmatprep.subr.bf16.mxu0 0
      %784 = vmatpush1.bf16.msra.mxu0 %v771
      %785 = vmatprep.subr.bf16.mxu0 0
      %786 = vmatpush1.bf16.msra.mxu0 %v772
      %787 = vmatprep.subr.bf16.mxu0 0
      %788 = vmatpush1.bf16.msra.mxu0 %v773
      %789 = vmatprep.subr.bf16.mxu0 0
      %790 = vmatpush1.bf16.msra.mxu0 %v774
      %791 = vmatprep.subr.bf16.mxu0 0
      %792 = vmatpush1.bf16.msra.mxu0 0
      %793 = vmatprep.subr.bf16.mxu0 0
      %794 = vmatpush1.bf16.msra.mxu0 0
      %795 = vmatprep.subr.bf16.mxu0 0
      %796 = vmatpush1.bf16.msra.mxu0 0
      %797 = vmatprep.subr.bf16.mxu0 0
      %798 = vmatpush1.bf16.msra.mxu0 0
      %799 = vmatprep.subr.bf16.mxu0 0
      %800 = vmatpush1.bf16.msra.mxu0 0
      %801 = vmatprep.subr.bf16.mxu0 0
      %802 = vmatpush1.bf16.msra.mxu0 0
      %803 = vmatprep.subr.bf16.mxu0 0
      %804 = vmatpush1.bf16.msra.mxu0 0
      %805 = vmatprep.subr.bf16.mxu0 0
      %806 = vmatpush1.bf16.msra.mxu0 0
      %807 = vmatprep.subr.bf16.mxu0 0
      %808 = vmatpush1.bf16.msra.mxu0 0
      %809 = vmatprep.subr.bf16.mxu0 0
      %810 = vmatpush1.bf16.msra.mxu0 0
      %811 = vmatprep.subr.bf16.mxu0 0
      %812 = vmatpush1.bf16.msra.mxu0 0
      %813 = vmatprep.subr.bf16.mxu0 0
      %814 = vmatpush1.bf16.msra.mxu0 0
      %815 = vmatprep.mubr.bf16.mxu0 0
      %816 = vmatmul.mubr.bf16.gmra.mrb[0].mxu0 %v781
      %v817 = vpop.f32.mrb[0].mxu0
      %v818 = vadd.f32 %v754, %v817
      %v819 = vpop.f32.mrb[0].mxu0
      %v820 = vpop.f32.mrb[0].mxu0
      %v821 = vpop.f32.mrb[0].mxu0
      %822 = vdwg.mxu0
      %v823 = vadd.f32 %v818, %v668
      %v824 = vsel %vm353, %v823, 0.0
      %825 = vadd.xlane.f32.xlu0 %v824
      %v826 = vpop.xlane.xlu0 %825
      %v827 = vmul.f32 %v826, %v357
      %v828 = vsub.f32 %v823, %v827
      %v829 = vmul.f32 %v828, %v828
      %v830 = vsel %vm353, %v829, 0.0
      %831 = vadd.xlane.f32.xlu0 %v830
      %v832 = vpop.xlane.xlu0 %831
      %v833 = vmul.f32 %v832, %v357
      %v834 = vadd.f32 %v833, 1e-12
      %v835 = vrsqrt.pop %v834
      %v836 = vmul.f32 %v828, %v835
      %v837 = vlaneseq
      %v838 = vshrl.u32 %v837, 7
      %v839 = vsub.s32 6, %v838
      %v840 = vrot.slane %v378, %v839
      %v841 = vmul.f32 %v836, %v840
      %v842 = vlaneseq
      %v843 = vshrl.u32 %v842, 7
      %v844 = vsub.s32 7, %v843
      %v845 = vrot.slane %v378, %v844
      %v846 = vadd.f32 %v841, %v845
      %s847 = scalar_lea.vmem %s3, 8
      %v848 = vld [vmem:[%s847] sm:$0xff]
      %v849 = vpack.c.bf16 %v846, %v846
      %s850 = scalar_lea.vmem %s4, 16
      %v851 = vld [vmem:[%s850] sm:$0xf]
      %v852 = vld [vmem:[%s850 + $0x4] sm:$0xf]
      %v853 = vld [vmem:[%s850 + $0x8] sm:$0xf]
      %v854 = vld [vmem:[%s850 + $0xc] sm:$0xf]
      %v855 = vlaneseq
      %v856 = vshrl.u32 %v855, 7
      %v857 = vsub.s32 0, %v856
      %v858 = vrot.slane %v848, %v857
      %v863 = vunpack.c.l.b16 %v851
      %v864 = vunpack.c.l.b16 %v852
      %v865 = vunpack.c.l.b16 %v853
      %v866 = vunpack.c.l.b16 %v854
      %v867 = vpack.c.b16 %v864, %v863
      %v868 = vpack.c.b16 %v866, %v865
      %v872 = vsel %vm353, %v849, 0
      %874 = vmatprep.subr.bf16.mxu0 0
      %875 = vmatpush1.bf16.msra.mxu0 %v867
      %876 = vmatprep.subr.bf16.mxu0 0
      %877 = vmatpush1.bf16.msra.mxu0 %v868
      %878 = vmatprep.subr.bf16.mxu0 0
      %879 = vmatpush1.bf16.msra.mxu0 0
      %880 = vmatprep.subr.bf16.mxu0 0
      %881 = vmatpush1.bf16.msra.mxu0 0
      %882 = vmatprep.subr.bf16.mxu0 0
      %883 = vmatpush1.bf16.msra.mxu0 0
      %884 = vmatprep.subr.bf16.mxu0 0
      %885 = vmatpush1.bf16.msra.mxu0 0
      %886 = vmatprep.subr.bf16.mxu0 0
      %887 = vmatpush1.bf16.msra.mxu0 0
      %888 = vmatprep.subr.bf16.mxu0 0
      %889 = vmatpush1.bf16.msra.mxu0 0
      %890 = vmatprep.subr.bf16.mxu0 0
      %891 = vmatpush1.bf16.msra.mxu0 0
      %892 = vmatprep.subr.bf16.mxu0 0
      %893 = vmatpush1.bf16.msra.mxu0 0
      %894 = vmatprep.subr.bf16.mxu0 0
      %895 = vmatpush1.bf16.msra.mxu0 0
      %896 = vmatprep.subr.bf16.mxu0 0
      %897 = vmatpush1.bf16.msra.mxu0 0
      %898 = vmatprep.subr.bf16.mxu0 0
      %899 = vmatpush1.bf16.msra.mxu0 0
      %900 = vmatprep.subr.bf16.mxu0 0
      %901 = vmatpush1.bf16.msra.mxu0 0
      %902 = vmatprep.subr.bf16.mxu0 0
      %903 = vmatpush1.bf16.msra.mxu0 0
      %904 = vmatprep.subr.bf16.mxu0 0
      %905 = vmatpush1.bf16.msra.mxu0 0
      %906 = vmatprep.mubr.bf16.mxu0 0
      %907 = vmatmul.mubr.bf16.gmra.mrb[0].mxu0 %v872
      %v908 = vpop.f32.mrb[0].mxu0
      %v909 = vadd.f32 %v858, %v908
      %v910 = vpop.f32.mrb[0].mxu0
      %v911 = vpop.f32.mrb[0].mxu0
      %v912 = vpop.f32.mrb[0].mxu0
      %913 = vdwg.mxu0
      %v914 = vpack.c.bf16 %v909, %v909
      %v916 = vrot.slane %v914, 4
      %917 = vrot.lane.b32.xlu0 %v916, 112
      %v918 = vpop.permute.xlu0 %917
      %v921 = vsel %vm448, %v914, %v918
      %923 = vrot.lane.b32.xlu0 %v921, 96
      %v924 = vpop.permute.xlu0 %923
      %v925 = vsel %vm455, %v921, 0
      %v928 = vsel %vm455, %v924, 0
      %930 = vmatprep.subr.bf16.mxu0 0
      %931 = vmatpush1.bf16.xpose.msra.mxu0 %v928
      %932 = vmatprep.subr.bf16.mxu0 0
      %933 = vmatpush1.bf16.xpose.msra.mxu0 0
      %934 = vmatprep.subr.bf16.mxu0 0
      %935 = vmatpush1.bf16.xpose.msra.mxu0 0
      %936 = vmatprep.subr.bf16.mxu0 0
      %937 = vmatpush1.bf16.xpose.msra.mxu0 0
      %938 = vmatprep.subr.bf16.mxu0 0
      %939 = vmatpush1.bf16.xpose.msra.mxu0 0
      %940 = vmatprep.subr.bf16.mxu0 0
      %941 = vmatpush1.bf16.xpose.msra.mxu0 0
      %942 = vmatprep.subr.bf16.mxu0 0
      %943 = vmatpush1.bf16.xpose.msra.mxu0 0
      %944 = vmatprep.subr.bf16.mxu0 0
      %945 = vmatpush1.bf16.xpose.msra.mxu0 0
      %946 = vmatprep.subr.bf16.mxu0 0
      %947 = vmatpush1.bf16.xpose.msra.mxu0 0
      %948 = vmatprep.subr.bf16.mxu0 0
      %949 = vmatpush1.bf16.xpose.msra.mxu0 0
      %950 = vmatprep.subr.bf16.mxu0 0
      %951 = vmatpush1.bf16.xpose.msra.mxu0 0
      %952 = vmatprep.subr.bf16.mxu0 0
      %953 = vmatpush1.bf16.xpose.msra.mxu0 0
      %954 = vmatprep.subr.bf16.mxu0 0
      %955 = vmatpush1.bf16.xpose.msra.mxu0 0
      %956 = vmatprep.subr.bf16.mxu0 0
      %957 = vmatpush1.bf16.xpose.msra.mxu0 0
      %958 = vmatprep.subr.bf16.mxu0 0
      %959 = vmatpush1.bf16.xpose.msra.mxu0 0
      %960 = vmatprep.subr.bf16.mxu0 0
      %961 = vmatpush1.bf16.xpose.msra.mxu0 0
      %962 = vmatprep.mubr.bf16.mxu0 0
      %963 = vmatmul.mubr.bf16.gmra.mrb[0].mxu0 %v925
      %v964 = vpop.f32.mrb[0].mxu0
      %v965 = vadd.f32 0.0, %v964
      %v966 = vpop.f32.mrb[0].mxu0
      %v967 = vpop.f32.mrb[0].mxu0
      %v968 = vadd.f32 0.0, %v967
      %v969 = vpop.f32.mrb[0].mxu0
      %970 = vdwg.mxu0
      %v971 = vmul.f32 %v965, 0.25
      %v972 = vmul.f32 %v968, 0.25
      %v973 = vadd.f32 %v971, %v350
      %v974 = vadd.f32 %v972, %v351
      %v975 = vsel %vm455, %v973, -inf
      %976 = vmax.xlane.f32.xlu0 %v975
      %v977 = vpop.xlane.xlu0 %976
      %v978 = vsel %vm455, %v974, -inf
      %979 = vmax.xlane.f32.xlu0 %v978
      %v980 = vpop.xlane.xlu0 %979
      %v981 = vsub.f32 %v973, %v977
      %v982 = vsub.f32 %v974, %v980
      %v983 = vmul.f32 %v981, 1.442695
      %v984 = vpow.pop %v983
      %v985 = vmul.f32 %v982, 1.442695
      %v986 = vpow.pop %v985
      %v987 = vsel %vm455, %v984, 0.0
      %988 = vadd.xlane.f32.xlu0 %v987
      %v989 = vpop.xlane.xlu0 %988
      %v990 = vsel %vm455, %v986, 0.0
      %991 = vadd.xlane.f32.xlu0 %v990
      %v992 = vpop.xlane.xlu0 %991
      %v993 = vrcp.pop %v989
      %v994 = vmul.f32 %v984, %v993
      %v995 = vrcp.pop %v992
      %v996 = vmul.f32 %v986, %v995
      %v997 = vpack.c.bf16 %v996, %v994
      %998 = vrot.lane.b32.xlu0 %v921, 64
      %v999 = vpop.permute.xlu0 %998
      %v1002 = vsel %vm455, %v997, 0
      %1004 = vmatprep.subr.bf16.mxu0 0
      %1005 = vmatpush1.bf16.msra.mxu0 %v999
      %1006 = vmatprep.subr.bf16.mxu0 0
      %1007 = vmatpush1.bf16.msra.mxu0 0
      %1008 = vmatprep.subr.bf16.mxu0 0
      %1009 = vmatpush1.bf16.msra.mxu0 0
      %1010 = vmatprep.subr.bf16.mxu0 0
      %1011 = vmatpush1.bf16.msra.mxu0 0
      %1012 = vmatprep.subr.bf16.mxu0 0
      %1013 = vmatpush1.bf16.msra.mxu0 0
      %1014 = vmatprep.subr.bf16.mxu0 0
      %1015 = vmatpush1.bf16.msra.mxu0 0
      %1016 = vmatprep.subr.bf16.mxu0 0
      %1017 = vmatpush1.bf16.msra.mxu0 0
      %1018 = vmatprep.subr.bf16.mxu0 0
      %1019 = vmatpush1.bf16.msra.mxu0 0
      %1020 = vmatprep.subr.bf16.mxu0 0
      %1021 = vmatpush1.bf16.msra.mxu0 0
      %1022 = vmatprep.subr.bf16.mxu0 0
      %1023 = vmatpush1.bf16.msra.mxu0 0
      %1024 = vmatprep.subr.bf16.mxu0 0
      %1025 = vmatpush1.bf16.msra.mxu0 0
      %1026 = vmatprep.subr.bf16.mxu0 0
      %1027 = vmatpush1.bf16.msra.mxu0 0
      %1028 = vmatprep.subr.bf16.mxu0 0
      %1029 = vmatpush1.bf16.msra.mxu0 0
      %1030 = vmatprep.subr.bf16.mxu0 0
      %1031 = vmatpush1.bf16.msra.mxu0 0
      %1032 = vmatprep.subr.bf16.mxu0 0
      %1033 = vmatpush1.bf16.msra.mxu0 0
      %1034 = vmatprep.subr.bf16.mxu0 0
      %1035 = vmatpush1.bf16.msra.mxu0 0
      %1036 = vmatprep.mubr.bf16.mxu0 0
      %1037 = vmatmul.mubr.bf16.gmra.mrb[0].mxu0 %v1002
      %v1038 = vpop.f32.mrb[0].mxu0
      %v1039 = vadd.f32 0.0, %v1038
      %v1040 = vpop.f32.mrb[0].mxu0
      %v1041 = vpop.f32.mrb[0].mxu0
      %v1042 = vadd.f32 0.0, %v1041
      %v1043 = vpop.f32.mrb[0].mxu0
      %1044 = vdwg.mxu0
      %1046 = vrot.lane.b32.xlu0 %v1042, 16
      %v1047 = vpop.permute.xlu0 %1046
      %v1049 = vsel %vm455, %v1039, %v1047
      %v1050 = vpack.c.bf16 %v1049, %v1049
      %s1051 = scalar_lea.vmem %s5, 16
      %v1052 = vld [vmem:[%s1051] sm:$0xf]
      %v1053 = vld [vmem:[%s1051 + $0x4] sm:$0xf]
      %v1054 = vld [vmem:[%s1051 + $0x8] sm:$0xf]
      %v1055 = vld [vmem:[%s1051 + $0xc] sm:$0xf]
      %v1056 = vlaneseq
      %v1057 = vshrl.u32 %v1056, 7
      %v1058 = vsub.s32 1, %v1057
      %v1059 = vrot.slane %v848, %v1058
      %v1064 = vunpack.c.l.b16 %v1052
      %v1065 = vunpack.c.l.b16 %v1053
      %v1066 = vunpack.c.l.b16 %v1054
      %v1067 = vunpack.c.l.b16 %v1055
      %v1068 = vpack.c.b16 %v1065, %v1064
      %v1069 = vpack.c.b16 %v1067, %v1066
      %v1073 = vsel %vm353, %v1050, 0
      %1075 = vmatprep.subr.bf16.mxu0 0
      %1076 = vmatpush1.bf16.msra.mxu0 %v1068
      %1077 = vmatprep.subr.bf16.mxu0 0
      %1078 = vmatpush1.bf16.msra.mxu0 %v1069
      %1079 = vmatprep.subr.bf16.mxu0 0
      %1080 = vmatpush1.bf16.msra.mxu0 0
      %1081 = vmatprep.subr.bf16.mxu0 0
      %1082 = vmatpush1.bf16.msra.mxu0 0
      %1083 = vmatprep.subr.bf16.mxu0 0
      %1084 = vmatpush1.bf16.msra.mxu0 0
      %1085 = vmatprep.subr.bf16.mxu0 0
      %1086 = vmatpush1.bf16.msra.mxu0 0
      %1087 = vmatprep.subr.bf16.mxu0 0
      %1088 = vmatpush1.bf16.msra.mxu0 0
      %1089 = vmatprep.subr.bf16.mxu0 0
      %1090 = vmatpush1.bf16.msra.mxu0 0
      %1091 = vmatprep.subr.bf16.mxu0 0
      %1092 = vmatpush1.bf16.msra.mxu0 0
      %1093 = vmatprep.subr.bf16.mxu0 0
      %1094 = vmatpush1.bf16.msra.mxu0 0
      %1095 = vmatprep.subr.bf16.mxu0 0
      %1096 = vmatpush1.bf16.msra.mxu0 0
      %1097 = vmatprep.subr.bf16.mxu0 0
      %1098 = vmatpush1.bf16.msra.mxu0 0
      %1099 = vmatprep.subr.bf16.mxu0 0
      %1100 = vmatpush1.bf16.msra.mxu0 0
      %1101 = vmatprep.subr.bf16.mxu0 0
      %1102 = vmatpush1.bf16.msra.mxu0 0
      %1103 = vmatprep.subr.bf16.mxu0 0
      %1104 = vmatpush1.bf16.msra.mxu0 0
      %1105 = vmatprep.subr.bf16.mxu0 0
      %1106 = vmatpush1.bf16.msra.mxu0 0
      %1107 = vmatprep.mubr.bf16.mxu0 0
      %1108 = vmatmul.mubr.bf16.gmra.mrb[0].mxu0 %v1073
      %v1109 = vpop.f32.mrb[0].mxu0
      %v1110 = vadd.f32 %v1059, %v1109
      %v1111 = vpop.f32.mrb[0].mxu0
      %v1112 = vpop.f32.mrb[0].mxu0
      %v1113 = vpop.f32.mrb[0].mxu0
      %1114 = vdwg.mxu0
      %v1115 = vadd.f32 %v1110, %v846
      %v1116 = vsel %vm353, %v1115, 0.0
      %1117 = vadd.xlane.f32.xlu0 %v1116
      %v1118 = vpop.xlane.xlu0 %1117
      %v1119 = vmul.f32 %v1118, %v357
      %v1120 = vsub.f32 %v1115, %v1119
      %v1121 = vmul.f32 %v1120, %v1120
      %v1122 = vsel %vm353, %v1121, 0.0
      %1123 = vadd.xlane.f32.xlu0 %v1122
      %v1124 = vpop.xlane.xlu0 %1123
      %v1125 = vmul.f32 %v1124, %v357
      %v1126 = vadd.f32 %v1125, 1e-12
      %v1127 = vrsqrt.pop %v1126
      %v1128 = vmul.f32 %v1120, %v1127
      %v1129 = vlaneseq
      %v1130 = vshrl.u32 %v1129, 7
      %v1131 = vsub.s32 2, %v1130
      %v1132 = vrot.slane %v848, %v1131
      %v1133 = vmul.f32 %v1128, %v1132
      %v1134 = vlaneseq
      %v1135 = vshrl.u32 %v1134, 7
      %v1136 = vsub.s32 3, %v1135
      %v1137 = vrot.slane %v848, %v1136
      %v1138 = vadd.f32 %v1133, %v1137
      %v1139 = vpack.c.bf16 %v1138, %v1138
      %s1140 = scalar_lea.vmem %s6, 16
      %v1141 = vld [vmem:[%s1140] sm:$0xf]
      %v1142 = vld [vmem:[%s1140 + $0x4] sm:$0xf]
      %v1143 = vld [vmem:[%s1140 + $0x8] sm:$0xf]
      %v1144 = vld [vmem:[%s1140 + $0xc] sm:$0xf]
      %v1145 = vlaneseq
      %v1146 = vshrl.u32 %v1145, 7
      %v1147 = vsub.s32 4, %v1146
      %v1148 = vrot.slane %v848, %v1147
      %v1153 = vunpack.c.l.b16 %v1141
      %v1154 = vunpack.c.l.b16 %v1142
      %v1155 = vunpack.c.l.b16 %v1143
      %v1156 = vunpack.c.l.b16 %v1144
      %v1157 = vpack.c.b16 %v1154, %v1153
      %v1158 = vpack.c.b16 %v1156, %v1155
      %v1162 = vsel %vm353, %v1139, 0
      %1164 = vmatprep.subr.bf16.mxu0 0
      %1165 = vmatpush1.bf16.msra.mxu0 %v1157
      %1166 = vmatprep.subr.bf16.mxu0 0
      %1167 = vmatpush1.bf16.msra.mxu0 %v1158
      %1168 = vmatprep.subr.bf16.mxu0 0
      %1169 = vmatpush1.bf16.msra.mxu0 0
      %1170 = vmatprep.subr.bf16.mxu0 0
      %1171 = vmatpush1.bf16.msra.mxu0 0
      %1172 = vmatprep.subr.bf16.mxu0 0
      %1173 = vmatpush1.bf16.msra.mxu0 0
      %1174 = vmatprep.subr.bf16.mxu0 0
      %1175 = vmatpush1.bf16.msra.mxu0 0
      %1176 = vmatprep.subr.bf16.mxu0 0
      %1177 = vmatpush1.bf16.msra.mxu0 0
      %1178 = vmatprep.subr.bf16.mxu0 0
      %1179 = vmatpush1.bf16.msra.mxu0 0
      %1180 = vmatprep.subr.bf16.mxu0 0
      %1181 = vmatpush1.bf16.msra.mxu0 0
      %1182 = vmatprep.subr.bf16.mxu0 0
      %1183 = vmatpush1.bf16.msra.mxu0 0
      %1184 = vmatprep.subr.bf16.mxu0 0
      %1185 = vmatpush1.bf16.msra.mxu0 0
      %1186 = vmatprep.subr.bf16.mxu0 0
      %1187 = vmatpush1.bf16.msra.mxu0 0
      %1188 = vmatprep.subr.bf16.mxu0 0
      %1189 = vmatpush1.bf16.msra.mxu0 0
      %1190 = vmatprep.subr.bf16.mxu0 0
      %1191 = vmatpush1.bf16.msra.mxu0 0
      %1192 = vmatprep.subr.bf16.mxu0 0
      %1193 = vmatpush1.bf16.msra.mxu0 0
      %1194 = vmatprep.subr.bf16.mxu0 0
      %1195 = vmatpush1.bf16.msra.mxu0 0
      %1196 = vmatprep.mubr.bf16.mxu0 0
      %1197 = vmatmul.mubr.bf16.gmra.mrb[0].mxu0 %v1162
      %v1198 = vpop.f32.mrb[0].mxu0
      %v1199 = vadd.f32 %v1148, %v1198
      %v1200 = vpop.f32.mrb[0].mxu0
      %v1201 = vpop.f32.mrb[0].mxu0
      %v1202 = vpop.f32.mrb[0].mxu0
      %1203 = vdwg.mxu0
      %v1204 = vmul.f32 %v1199, %v1199
      %v1205 = vmul.f32 %v1199, %v1204
      %v1206 = vmul.f32 %v1205, 0.044715
      %v1207 = vadd.f32 %v1199, %v1206
      %v1208 = vmul.f32 %v1207, 0.7978846
      %v1209 = vtanh.pop %v1208
      %v1210 = vadd.f32 %v1209, 1.0
      %v1211 = vmul.f32 %v1210, 0.5
      %v1212 = vmul.f32 %v1199, %v1211
      %v1213 = vpack.c.bf16 %v1212, %v1212
      %s1214 = scalar_lea.vmem %s7, 32
      %v1215 = vld [vmem:[%s1214] sm:$0xf]
      %v1216 = vld [vmem:[%s1214 + $0x4] sm:$0xf]
      %v1217 = vld [vmem:[%s1214 + $0x8] sm:$0xf]
      %v1218 = vld [vmem:[%s1214 + $0xc] sm:$0xf]
      %v1219 = vld [vmem:[%s1214 + $0x10] sm:$0xf]
      %v1220 = vld [vmem:[%s1214 + $0x14] sm:$0xf]
      %v1221 = vld [vmem:[%s1214 + $0x18] sm:$0xf]
      %v1222 = vld [vmem:[%s1214 + $0x1c] sm:$0xf]
      %v1223 = vlaneseq
      %v1224 = vshrl.u32 %v1223, 7
      %v1225 = vsub.s32 5, %v1224
      %v1226 = vrot.slane %v848, %v1225
      %v1235 = vunpack.c.l.b16 %v1215
      %v1236 = vunpack.c.l.b16 %v1216
      %v1237 = vunpack.c.l.b16 %v1217
      %v1238 = vunpack.c.l.b16 %v1218
      %v1239 = vunpack.c.l.b16 %v1219
      %v1240 = vunpack.c.l.b16 %v1220
      %v1241 = vunpack.c.l.b16 %v1221
      %v1242 = vunpack.c.l.b16 %v1222
      %v1243 = vpack.c.b16 %v1236, %v1235
      %v1244 = vpack.c.b16 %v1238, %v1237
      %v1245 = vpack.c.b16 %v1240, %v1239
      %v1246 = vpack.c.b16 %v1242, %v1241
      %v1252 = vsel %vm779, %v1213, 0
      %1254 = vmatprep.subr.bf16.mxu0 0
      %1255 = vmatpush1.bf16.msra.mxu0 %v1243
      %1256 = vmatprep.subr.bf16.mxu0 0
      %1257 = vmatpush1.bf16.msra.mxu0 %v1244
      %1258 = vmatprep.subr.bf16.mxu0 0
      %1259 = vmatpush1.bf16.msra.mxu0 %v1245
      %1260 = vmatprep.subr.bf16.mxu0 0
      %1261 = vmatpush1.bf16.msra.mxu0 %v1246
      %1262 = vmatprep.subr.bf16.mxu0 0
      %1263 = vmatpush1.bf16.msra.mxu0 0
      %1264 = vmatprep.subr.bf16.mxu0 0
      %1265 = vmatpush1.bf16.msra.mxu0 0
      %1266 = vmatprep.subr.bf16.mxu0 0
      %1267 = vmatpush1.bf16.msra.mxu0 0
      %1268 = vmatprep.subr.bf16.mxu0 0
      %1269 = vmatpush1.bf16.msra.mxu0 0
      %1270 = vmatprep.subr.bf16.mxu0 0
      %1271 = vmatpush1.bf16.msra.mxu0 0
      %1272 = vmatprep.subr.bf16.mxu0 0
      %1273 = vmatpush1.bf16.msra.mxu0 0
      %1274 = vmatprep.subr.bf16.mxu0 0
      %1275 = vmatpush1.bf16.msra.mxu0 0
      %1276 = vmatprep.subr.bf16.mxu0 0
      %1277 = vmatpush1.bf16.msra.mxu0 0
      %1278 = vmatprep.subr.bf16.mxu0 0
      %1279 = vmatpush1.bf16.msra.mxu0 0
      %1280 = vmatprep.subr.bf16.mxu0 0
      %1281 = vmatpush1.bf16.msra.mxu0 0
      %1282 = vmatprep.subr.bf16.mxu0 0
      %1283 = vmatpush1.bf16.msra.mxu0 0
      %1284 = vmatprep.subr.bf16.mxu0 0
      %1285 = vmatpush1.bf16.msra.mxu0 0
      %1286 = vmatprep.mubr.bf16.mxu0 0
      %1287 = vmatmul.mubr.bf16.gmra.mrb[0].mxu0 %v1252
      %v1288 = vpop.f32.mrb[0].mxu0
      %v1289 = vadd.f32 %v1226, %v1288
      %v1290 = vpop.f32.mrb[0].mxu0
      %v1291 = vpop.f32.mrb[0].mxu0
      %v1292 = vpop.f32.mrb[0].mxu0
      %1293 = vdwg.mxu0
      %v1294 = vadd.f32 %v1289, %v1138
      %v1295 = vsel %vm353, %v1294, 0.0
      %1296 = vadd.xlane.f32.xlu0 %v1295
      %v1297 = vpop.xlane.xlu0 %1296
      %v1298 = vmul.f32 %v1297, %v357
      %v1299 = vsub.f32 %v1294, %v1298
      %v1300 = vmul.f32 %v1299, %v1299
      %v1301 = vsel %vm353, %v1300, 0.0
      %1302 = vadd.xlane.f32.xlu0 %v1301
      %v1303 = vpop.xlane.xlu0 %1302
      %v1304 = vmul.f32 %v1303, %v357
      %v1305 = vadd.f32 %v1304, 1e-12
      %v1306 = vrsqrt.pop %v1305
      %v1307 = vmul.f32 %v1299, %v1306
      %v1308 = vlaneseq
      %v1309 = vshrl.u32 %v1308, 7
      %v1310 = vsub.s32 6, %v1309
      %v1311 = vrot.slane %v848, %v1310
      %v1312 = vmul.f32 %v1307, %v1311
      %v1313 = vlaneseq
      %v1314 = vshrl.u32 %v1313, 7
      %v1315 = vsub.s32 7, %v1314
      %v1316 = vrot.slane %v848, %v1315
      %v1317 = vadd.f32 %v1312, %v1316
      %v1318 = vpack.c.bf16 %v1317, %v1317
      %v1319 = vld [vmem:[%s8] sm:$0xf]
      %v1320 = vld [vmem:[%s8 + $0x4] sm:$0xf]
      %v1321 = vld [vmem:[%s8 + $0x8] sm:$0xf]
      %v1322 = vld [vmem:[%s8 + $0xc] sm:$0xf]
      %v1327 = vunpack.c.l.b16 %v1319
      %v1328 = vunpack.c.l.b16 %v1320
      %v1329 = vunpack.c.l.b16 %v1321
      %v1330 = vunpack.c.l.b16 %v1322
      %v1331 = vpack.c.b16 %v1328, %v1327
      %v1332 = vpack.c.b16 %v1330, %v1329
      %v1336 = vrot.slane %v349, 2
      %v1339 = vsel %vm353, %v1318, 0
      %1341 = vmatprep.subr.bf16.mxu0 0
      %1342 = vmatpush1.bf16.msra.mxu0 %v1331
      %1343 = vmatprep.subr.bf16.mxu0 0
      %1344 = vmatpush1.bf16.msra.mxu0 %v1332
      %1345 = vmatprep.subr.bf16.mxu0 0
      %1346 = vmatpush1.bf16.msra.mxu0 0
      %1347 = vmatprep.subr.bf16.mxu0 0
      %1348 = vmatpush1.bf16.msra.mxu0 0
      %1349 = vmatprep.subr.bf16.mxu0 0
      %1350 = vmatpush1.bf16.msra.mxu0 0
      %1351 = vmatprep.subr.bf16.mxu0 0
      %1352 = vmatpush1.bf16.msra.mxu0 0
      %1353 = vmatprep.subr.bf16.mxu0 0
      %1354 = vmatpush1.bf16.msra.mxu0 0
      %1355 = vmatprep.subr.bf16.mxu0 0
      %1356 = vmatpush1.bf16.msra.mxu0 0
      %1357 = vmatprep.subr.bf16.mxu0 0
      %1358 = vmatpush1.bf16.msra.mxu0 0
      %1359 = vmatprep.subr.bf16.mxu0 0
      %1360 = vmatpush1.bf16.msra.mxu0 0
      %1361 = vmatprep.subr.bf16.mxu0 0
      %1362 = vmatpush1.bf16.msra.mxu0 0
      %1363 = vmatprep.subr.bf16.mxu0 0
      %1364 = vmatpush1.bf16.msra.mxu0 0
      %1365 = vmatprep.subr.bf16.mxu0 0
      %1366 = vmatpush1.bf16.msra.mxu0 0
      %1367 = vmatprep.subr.bf16.mxu0 0
      %1368 = vmatpush1.bf16.msra.mxu0 0
      %1369 = vmatprep.subr.bf16.mxu0 0
      %1370 = vmatpush1.bf16.msra.mxu0 0
      %1371 = vmatprep.subr.bf16.mxu0 0
      %1372 = vmatpush1.bf16.msra.mxu0 0
      %1373 = vmatprep.mubr.bf16.mxu0 0
      %1374 = vmatmul.mubr.bf16.gmra.mrb[0].mxu0 %v1339
      %v1375 = vpop.f32.mrb[0].mxu0
      %v1376 = vadd.f32 %v1336, %v1375
      %v1377 = vpop.f32.mrb[0].mxu0
      %v1378 = vpop.f32.mrb[0].mxu0
      %v1379 = vpop.f32.mrb[0].mxu0
      %1380 = vdwg.mxu0
      %v1381 = vlaneseq
      %v1382 = vshrl.u32 %v1381, 7
      %v1383 = vsub.s32 0, %v1382
      %v1384 = vrot.slane %v1376, %v1383
      %1385 = vst [vmem:[%s347] sm:$0xff] %v1384
      %p1386 = scmp.lt.s32.totalorder %s20, 1
      %s1387 = scalar_select %p1386, %s20, 1
      %s1388 = smul.addr %s1387, 8
      %s1389 = scalar_lea.vmem %s9, %s1388
      // Predicated region
      $region57: #{custom_bert_forward.1} parent=55 // pred_check
        %p1390 = pneg %p237
      $region58: #{custom_bert_forward.1} parent=55 // pred_check_branch
        %1392 = sbr.rel (%p1390) target = $region60
      $region59: #{custom_bert_forward.1} parent=55 // pred_region
        _
      $region60: #{custom_bert_forward.1} parent=55 // pred_fallthru
        _
    $region56: #{custom_bert_forward.1} parent=5 // pred_fallthru
      _
    %p1393 = scmp.le.s32.totalorder 2, %s15
    // Predicated region
    $region61: #{custom_bert_forward.1} parent=5 // pred_check
      %p1394 = pneg %p1393
    $region62: #{custom_bert_forward.1} parent=5 // pred_check_branch
      %1396 = sbr.rel (%p1394) target = $region64
    $region63: #{custom_bert_forward.1} parent=5 // pred_region
      %s1397 = ssub.s32 %s15, 2
      // Predicated region
      $region65: #{custom_bert_forward.1} parent=63 // pred_check
        %p1398 = pneg %p243
      $region66: #{custom_bert_forward.1} parent=63 // pred_check_branch
        %1400 = sbr.rel (%p1398) target = $region68
      $region67: #{custom_bert_forward.1} parent=63 // pred_region
        %p1401 = scmp.lt.s32.totalorder %s21, 1
        %s1402 = scalar_select %p1401, %s21, 1
        %s1403 = smul.addr %s1402, 8
        %s1404 = scalar_lea.vmem %s9, %s1403
      $region68: #{custom_bert_forward.1} parent=63 // pred_fallthru
        _
    $region64: #{custom_bert_forward.1} parent=5 // pred_fallthru
      _
  $region6: #{custom_bert_forward.1} parent=0 // loop_footer
    %s19 = sadd.s32 1, %s15
  $region7: #{custom_bert_forward.1} parent=0 // loop_footer_branch
    %14 = sbr.rel target = $region3
  $region8: #{custom_bert_forward.1} parent=0 // loop_exit
    _

</llo_original>
